<compile_context>
chip_gen: v7x
topology: tpu7x:2x2x1
jax: 0.10.0
libtpu: 0.0.40
codegen_flags: <defaults>
</compile_context>

<pallas_src>
import jax
import jax.numpy as jnp
from jax.experimental import pallas as pl
from jax.experimental.pallas import tpu as pltpu

# Logical (PyTorch) sizes and lane-aligned (multiple-of-128) padded sizes.
IN_F, H1, H2, OUT_F = 784, 300, 100, 10
IN_P, H1_P, H2_P, OUT_P = 896, 384, 128, 128


def _mlp_kernel(x_ref, w1_ref, b1_ref, w2_ref, b2_ref, w3_ref, b3_ref, o_ref):
    # Layer 1: (TB,896) @ (896,384) + (1,384), ReLU
    h1 = jnp.dot(x_ref[...], w1_ref[...], preferred_element_type=jnp.float32)
    h1 = jnp.maximum(h1 + b1_ref[...], 0.0)
    # Layer 2: (TB,384) @ (384,128) + (1,128), ReLU
    h2 = jnp.dot(h1, w2_ref[...], preferred_element_type=jnp.float32)
    h2 = jnp.maximum(h2 + b2_ref[...], 0.0)
    # Layer 3: (TB,128) @ (128,128) + (1,128)   (no activation)
    out = jnp.dot(h2, w3_ref[...], preferred_element_type=jnp.float32)
    o_ref[...] = (out + b3_ref[...]).astype(o_ref.dtype)


def _round_up(n, m):
    return ((n + m - 1) // m) * m


def _pad2d(a, rows, cols):
    a = a.astype(jnp.float32)
    return jnp.pad(a, ((0, rows - a.shape[0]), (0, cols - a.shape[1])))


def pad_params(params):
    """Zero-pad params to lane-aligned shapes (exact through ReLU)."""
    w1, b1, w2, b2, w3, b3 = params
    return (
        _pad2d(w1, IN_P, H1_P), _pad2d(b1, 1, H1_P),
        _pad2d(w2, H1_P, H2_P), _pad2d(b2, 1, H2_P),
        _pad2d(w3, H2_P, OUT_P), _pad2d(b3, 1, OUT_P),
    )


def fully_connected_forward(x, params, *, batch_tile=256):
    """x: (B, C, H, W) or (B, 784).  Returns (B, 10) float32."""
    w1p, b1p, w2p, b2p, w3p, b3p = pad_params(params)

    B = x.shape[0]
    x2d = x.reshape(B, -1).astype(jnp.float32)  # torch.flatten(x, start_dim=1)

    # Batch tile: multiple of 8 (sublane), capped at `batch_tile`; pad batch so
    # the grid divides evenly.  Padded rows are zeros and are sliced off below.
    tb = min(batch_tile, _round_up(B, 8))
    b_pad = _round_up(B, tb)
    x2d = jnp.pad(x2d, ((0, b_pad - B), (0, IN_P - IN_F)))

    num_tiles = pl.cdiv(b_pad, tb)

    # Advisory cost estimate for the XLA scheduler.
    flops = 2 * B * (IN_F * H1 + H1 * H2 + H2 * OUT_F)
    bytes_accessed = 4 * (
        b_pad * IN_P                                   # x
        + IN_P * H1_P + H1_P                           # w1, b1
        + H1_P * H2_P + H2_P                           # w2, b2
        + H2_P * OUT_P + OUT_P                         # w3, b3
        + b_pad * OUT_P                                # out
    )

    def _resident(shape):
        # Constant index_map: weight/bias block is loaded once and stays
        # VMEM-resident across all grid steps.
        return pl.BlockSpec(shape, lambda i: (0, 0))

    out = pl.pallas_call(
        _mlp_kernel,
        out_shape=jax.ShapeDtypeStruct((b_pad, OUT_P), jnp.float32),
        grid=(num_tiles,),
        in_specs=[
            pl.BlockSpec((tb, IN_P), lambda i: (i, 0)),   # x tile (pipelined)
            _resident((IN_P, H1_P)),                      # w1
            _resident((1, H1_P)),                         # b1
            _resident((H1_P, H2_P)),                      # w2
            _resident((1, H2_P)),                         # b2
            _resident((H2_P, OUT_P)),                     # w3
            _resident((1, OUT_P)),                        # b3
        ],
        out_specs=pl.BlockSpec((tb, OUT_P), lambda i: (i, 0)),
        compiler_params=pltpu.CompilerParams(
            dimension_semantics=("parallel",),
        ),
        cost_estimate=pl.CostEstimate(
            flops=flops, transcendentals=0, bytes_accessed=bytes_accessed),
    )(x2d, w1p, b1p, w2p, b2p, w3p, b3p)

    return out[:B, :OUT_F]


def init_params(key, input_size=IN_F, h1=H1, h2=H2, output_size=OUT_F):
    """Deterministic init mimicking torch.nn.Linear default
    (U(-1/sqrt(fan_in), 1/sqrt(fan_in))).  Weights stored (in, out)."""
    keys = jax.random.split(key, 6)

    def linear(kw, kb, fan_in, fan_out):
        bound = 1.0 / jnp.sqrt(jnp.float32(fan_in))
        w = jax.random.uniform(kw, (fan_in, fan_out), jnp.float32, -bound, bound)
        b = jax.random.uniform(kb, (1, fan_out), jnp.float32, -bound, bound)
        return w, b

    w1, b1 = linear(keys[0], keys[1], input_size, h1)
    w2, b2 = linear(keys[2], keys[3], h1, h2)
    w3, b3 = linear(keys[4], keys[5], h2, output_size)
    return (w1, b1, w2, b2, w3, b3)


def reference_forward(x, params):
    """Plain-JAX reference for correctness checking."""
    w1, b1, w2, b2, w3, b3 = params
    x2d = x.reshape(x.shape[0], -1).astype(jnp.float32)
    h = jnp.maximum(x2d @ w1 + b1, 0.0)
    h = jnp.maximum(h @ w2 + b2, 0.0)
    return h @ w3 + b3


if __name__ == "__main__":
    key = jax.random.PRNGKey(0)
    k_params, k_x = jax.random.split(key)

    params = init_params(k_params)

    # MNIST-like input: NCHW, 784 = 1*28*28
    batch = 8
    x = jax.random.normal(k_x, (batch, 1, 28, 28), dtype=jnp.float32)

    out = fully_connected_forward(x, params)
    out = jax.block_until_ready(out)

    ref = reference_forward(x, params)
    assert out.shape == (batch, 10), out.shape
    assert jnp.allclose(out, ref, atol=1e-4, rtol=1e-4), "mismatch vs reference"

    print("KERNEL_OK")
</pallas_src>

<mosaic_0001>
module attributes {stable_mosaic.version = 11 : i64} {
  func.func @_mlp_kernel(%arg0: i32, %arg1: memref<8x896xf32, #tpu.memory_space<vmem>>, %arg2: memref<896x384xf32, #tpu.memory_space<vmem>>, %arg3: memref<1x384xf32, #tpu.memory_space<vmem>>, %arg4: memref<384x128xf32, #tpu.memory_space<vmem>>, %arg5: memref<1x128xf32, #tpu.memory_space<vmem>>, %arg6: memref<128x128xf32, #tpu.memory_space<vmem>>, %arg7: memref<1x128xf32, #tpu.memory_space<vmem>>, %arg8: memref<8x128xf32, #tpu.memory_space<vmem>>) attributes {dimension_semantics = [#tpu.dimension_semantics<parallel>], iteration_bounds = array<i64: 1>, scalar_prefetch = 0 : i64, scratch_operands = 0 : i64, tpu.core_type = #tpu.core_type<tc>, window_params = [{transform_indices = @transform_0, window_bounds = array<i64: 8, 896>}, {pipeline_mode = #tpu.pipeline_mode<synchronous>, transform_indices = @transform_1, window_bounds = array<i64: 896, 384>}, {pipeline_mode = #tpu.pipeline_mode<synchronous>, transform_indices = @transform_2, window_bounds = array<i64: 1, 384>}, {pipeline_mode = #tpu.pipeline_mode<synchronous>, transform_indices = @transform_3, window_bounds = array<i64: 384, 128>}, {pipeline_mode = #tpu.pipeline_mode<synchronous>, transform_indices = @transform_4, window_bounds = array<i64: 1, 128>}, {pipeline_mode = #tpu.pipeline_mode<synchronous>, transform_indices = @transform_5, window_bounds = array<i64: 128, 128>}, {pipeline_mode = #tpu.pipeline_mode<synchronous>, transform_indices = @transform_6, window_bounds = array<i64: 1, 128>}, {transform_indices = @transform_7, window_bounds = array<i64: 8, 128>}]} {
    %c0 = arith.constant 0 : index
    %c0_0 = arith.constant 0 : index
    %0 = vector.load %arg1[%c0, %c0_0] : memref<8x896xf32, #tpu.memory_space<vmem>>, vector<8x896xf32>
    %c0_1 = arith.constant 0 : index
    %c0_2 = arith.constant 0 : index
    %1 = vector.load %arg2[%c0_1, %c0_2] : memref<896x384xf32, #tpu.memory_space<vmem>>, vector<896x384xf32>
    %cst = arith.constant dense<0.000000e+00> : vector<8x384xf32>
    %2 = tpu.matmul %0, %1, %cst {dimension_numbers = #tpu.dot_dimension_numbers<[1], [0], [0], [1], [0, 0, 1, 1], [], []>} : vector<8x896xf32>, vector<896x384xf32>, vector<8x384xf32> -> vector<8x384xf32>
    %c0_3 = arith.constant 0 : index
    %c0_4 = arith.constant 0 : index
    %3 = vector.load %arg3[%c0_3, %c0_4] : memref<1x384xf32, #tpu.memory_space<vmem>>, vector<1x384xf32>
    %4 = vector.broadcast %3 : vector<1x384xf32> to vector<8x384xf32>
    %5 = arith.addf %2, %4 : vector<8x384xf32>
    %cst_5 = arith.constant 0.000000e+00 : f32
    %6 = vector.broadcast %cst_5 : f32 to vector<8x384xf32>
    %7 = arith.maximumf %5, %6 : vector<8x384xf32>
    %c0_6 = arith.constant 0 : index
    %c0_7 = arith.constant 0 : index
    %8 = vector.load %arg4[%c0_6, %c0_7] : memref<384x128xf32, #tpu.memory_space<vmem>>, vector<384x128xf32>
    %cst_8 = arith.constant dense<0.000000e+00> : vector<8x128xf32>
    %9 = tpu.matmul %7, %8, %cst_8 {dimension_numbers = #tpu.dot_dimension_numbers<[1], [0], [0], [1], [0, 0, 1, 1], [], []>} : vector<8x384xf32>, vector<384x128xf32>, vector<8x128xf32> -> vector<8x128xf32>
    %c0_9 = arith.constant 0 : index
    %c0_10 = arith.constant 0 : index
    %10 = vector.load %arg5[%c0_9, %c0_10] : memref<1x128xf32, #tpu.memory_space<vmem>>, vector<1x128xf32>
    %11 = vector.broadcast %10 : vector<1x128xf32> to vector<8x128xf32>
    %12 = arith.addf %9, %11 : vector<8x128xf32>
    %cst_11 = arith.constant 0.000000e+00 : f32
    %13 = vector.broadcast %cst_11 : f32 to vector<8x128xf32>
    %14 = arith.maximumf %12, %13 : vector<8x128xf32>
    %c0_12 = arith.constant 0 : index
    %c0_13 = arith.constant 0 : index
    %15 = vector.load %arg6[%c0_12, %c0_13] : memref<128x128xf32, #tpu.memory_space<vmem>>, vector<128x128xf32>
    %cst_14 = arith.constant dense<0.000000e+00> : vector<8x128xf32>
    %16 = tpu.matmul %14, %15, %cst_14 {dimension_numbers = #tpu.dot_dimension_numbers<[1], [0], [0], [1], [0, 0, 1, 1], [], []>} : vector<8x128xf32>, vector<128x128xf32>, vector<8x128xf32> -> vector<8x128xf32>
    %c0_15 = arith.constant 0 : index
    %c0_16 = arith.constant 0 : index
    %17 = vector.load %arg7[%c0_15, %c0_16] : memref<1x128xf32, #tpu.memory_space<vmem>>, vector<1x128xf32>
    %18 = vector.broadcast %17 : vector<1x128xf32> to vector<8x128xf32>
    %19 = arith.addf %16, %18 : vector<8x128xf32>
    %c0_17 = arith.constant 0 : index
    %c0_18 = arith.constant 0 : index
    %20 = vector.load %arg8[%c0_17, %c0_18] : memref<8x128xf32, #tpu.memory_space<vmem>>, vector<8x128xf32>
    tpu.vector_store %arg8[%c0_17, %c0_18], %19 {strides = array<i32>} : memref<8x128xf32, #tpu.memory_space<vmem>>, vector<8x128xf32>,
    return
  }
  func.func @transform_0(%arg0: i32) -> (i32, i32) {
    %c0_i32 = arith.constant 0 : i32
    %c0_i32_0 = arith.constant 0 : i32
    return %arg0, %c0_i32 : i32, i32
  }
  func.func @transform_1(%arg0: i32) -> (i32, i32) {
    %c0_i32 = arith.constant 0 : i32
    %c0_i32_0 = arith.constant 0 : i32
    %c0_i32_1 = arith.constant 0 : i32
    return %c0_i32, %c0_i32_0 : i32, i32
  }
  func.func @transform_2(%arg0: i32) -> (i32, i32) {
    %c0_i32 = arith.constant 0 : i32
    %c0_i32_0 = arith.constant 0 : i32
    %c0_i32_1 = arith.constant 0 : i32
    return %c0_i32, %c0_i32_0 : i32, i32
  }
  func.func @transform_3(%arg0: i32) -> (i32, i32) {
    %c0_i32 = arith.constant 0 : i32
    %c0_i32_0 = arith.constant 0 : i32
    %c0_i32_1 = arith.constant 0 : i32
    return %c0_i32, %c0_i32_0 : i32, i32
  }
  func.func @transform_4(%arg0: i32) -> (i32, i32) {
    %c0_i32 = arith.constant 0 : i32
    %c0_i32_0 = arith.constant 0 : i32
    %c0_i32_1 = arith.constant 0 : i32
    return %c0_i32, %c0_i32_0 : i32, i32
  }
  func.func @transform_5(%arg0: i32) -> (i32, i32) {
    %c0_i32 = arith.constant 0 : i32
    %c0_i32_0 = arith.constant 0 : i32
    %c0_i32_1 = arith.constant 0 : i32
    return %c0_i32, %c0_i32_0 : i32, i32
  }
  func.func @transform_6(%arg0: i32) -> (i32, i32) {
    %c0_i32 = arith.constant 0 : i32
    %c0_i32_0 = arith.constant 0 : i32
    %c0_i32_1 = arith.constant 0 : i32
    return %c0_i32, %c0_i32_0 : i32, i32
  }
  func.func @transform_7(%arg0: i32) -> (i32, i32) {
    %c0_i32 = arith.constant 0 : i32
    %c0_i32_0 = arith.constant 0 : i32
    return %arg0, %c0_i32 : i32, i32
  }
}

</mosaic_0001>

<llo_original>
// kernel: tpu_custom_call.1
$region0: #{tpu_custom_call.1}
  #allocation0 [shape = 'u32[]', space=smem, size = 0x4, offset = 0x4, fixed_abs, tag = 'smem constant byte address 0x4 - core index']
  #allocation1 [shape = 'u32[144,128]{1,0:T(1,128)}', space=vmem, size = 0x12000, scoped, tag = 'internal scratch']
  %s0 = inlined_call_operand.hbm [shape: f32[8,896], index: 0, kind: input, shape index: {}]
  %s1 = inlined_call_operand.hbm [shape: f32[896,384], index: 1, kind: input, shape index: {}]
  %s2 = inlined_call_operand.hbm [shape: f32[1,384], index: 2, kind: input, shape index: {}]
  %s3 = inlined_call_operand.hbm [shape: f32[384,128], index: 3, kind: input, shape index: {}]
  %s4 = inlined_call_operand.hbm [shape: f32[1,128], index: 4, kind: input, shape index: {}]
  %s5 = inlined_call_operand.hbm [shape: f32[128,128], index: 5, kind: input, shape index: {}]
  %s6 = inlined_call_operand.hbm [shape: f32[1,128], index: 6, kind: input, shape index: {}]
  %s7 = inlined_call_operand.hbm [shape: f32[8,128], index: 7, kind: output, shape index: {}]
  %s8 = sld [smem:[#allocation0]]
  $region66: #{tpu_custom_call.1} parent=0
    _
  %s10 = ssub.s32 1, %s8
  %s11 = scalar_select 0, %s10, %s8
  $region1: #{tpu_custom_call.1} parent=0
    #allocation2 [shape = 'u8[28672]{0}', space=vmem, size = 0x7000, scoped, tag = 'input window, operand 0, single buffered']
    #allocation3 [shape = 's32[1]{0}', space=sflag, size = 0x4, scoped, tag = 'scoped memory for tpu_custom_call.1']
    #allocation4 [shape = 's32[1]{0}', space=sflag, size = 0x4, scoped, tag = 'scoped memory for tpu_custom_call.1']
    #allocation5 [shape = 'u8[1376256]{0}', space=vmem, size = 0x150000, scoped, tag = 'input window, operand 1, single buffered']
    #allocation6 [shape = 's32[1]{0}', space=sflag, size = 0x4, scoped, tag = 'scoped memory for tpu_custom_call.1']
    #allocation7 [shape = 'u8[1536]{0}', space=vmem, size = 0x800, scoped, tag = 'input window, operand 2, single buffered']
    #allocation8 [shape = 'u8[196608]{0}', space=vmem, size = 0x30000, scoped, tag = 'input window, operand 3, single buffered']
    #allocation9 [shape = 's32[1]{0}', space=sflag, size = 0x4, scoped, tag = 'scoped memory for tpu_custom_call.1']
    #allocation10 [shape = 'u8[512]{0}', space=vmem, size = 0x400, scoped, tag = 'input window, operand 4, single buffered']
    #allocation11 [shape = 'u8[65536]{0}', space=vmem, size = 0x10000, scoped, tag = 'input window, operand 5, single buffered']
    #allocation12 [shape = 's32[1]{0}', space=sflag, size = 0x4, scoped, tag = 'scoped memory for tpu_custom_call.1']
    #allocation13 [shape = 'u8[512]{0}', space=vmem, size = 0x400, scoped, tag = 'input window, operand 6, single buffered']
    #allocation14 [shape = 'u8[4096]{0}', space=vmem, size = 0x1000, scoped, tag = 'output window, operand 0, single buffered']
    %12 = vsyncpa [#allocation3], 0
    %13 = vsyncpa [#allocation6], 0
    %14 = vsyncpa [#allocation9], 0
    %15 = vsyncpa [#allocation12], 0
    %16 = vsyncpa [#allocation4], 0
    // Predicated region
    $region2: #{tpu_custom_call.1} parent=1 // pred_check
      _
    $region3: #{tpu_custom_call.1} parent=1 // pred_check_branch
      %18 = sbr.rel (0) target = $region5
    $region4: #{tpu_custom_call.1} parent=1 // pred_region
      %s20 = ssub.s32 896, 896
      %21 = vsyncadd [#allocation3], %s20
      %s23 = sshll.u32 [#allocation2], 4
      %s24 = int_to_ptr.vmem [resolvable:$true] %s23
      %26 = dma.hbm_to_vmem [thread:$0]  %s0, 896, %s24, [#allocation3]
    $region5: #{tpu_custom_call.1} parent=1 // pred_fallthru
      _
    // Predicated region
    $region6: #{tpu_custom_call.1} parent=1 // pred_check
      _
    $region7: #{tpu_custom_call.1} parent=1 // pred_check_branch
      %28 = sbr.rel (0) target = $region9
    $region8: #{tpu_custom_call.1} parent=1 // pred_region
      %s30 = ssub.s32 43008, 43008
      %31 = vsyncadd [#allocation6], %s30
      %s32 = sshll.u32 [#allocation5], 4
      %s33 = int_to_ptr.vmem [resolvable:$true] %s32
      %38 = dma.hbm_to_vmem [thread:$0]  %s1, 43008, %s33, [#allocation6], 384, 384, 24
    $region9: #{tpu_custom_call.1} parent=1 // pred_fallthru
      _
    // Predicated region
    $region10: #{tpu_custom_call.1} parent=1 // pred_check
      _
    $region11: #{tpu_custom_call.1} parent=1 // pred_check_branch
      %40 = sbr.rel (0) target = $region13
    $region12: #{tpu_custom_call.1} parent=1 // pred_region
      %s42 = ssub.s32 48, 48
      %43 = vsyncadd [#allocation6], %s42
      %s45 = sshll.u32 [#allocation7], 4
      %s46 = int_to_ptr.vmem [resolvable:$true] %s45
      %48 = dma.hbm_to_vmem [thread:$0]  %s2, 48, %s46, [#allocation6]
    $region13: #{tpu_custom_call.1} parent=1 // pred_fallthru
      _
    // Predicated region
    $region14: #{tpu_custom_call.1} parent=1 // pred_check
      _
    $region15: #{tpu_custom_call.1} parent=1 // pred_check_branch
      %50 = sbr.rel (0) target = $region17
    $region16: #{tpu_custom_call.1} parent=1 // pred_region
      %s52 = ssub.s32 6144, 6144
      %53 = vsyncadd [#allocation9], %s52
      %s54 = sshll.u32 [#allocation8], 4
      %s55 = int_to_ptr.vmem [resolvable:$true] %s54
      %60 = dma.hbm_to_vmem [thread:$0]  %s3, 6144, %s55, [#allocation9], 128, 128, 8
    $region17: #{tpu_custom_call.1} parent=1 // pred_fallthru
      _
    // Predicated region
    $region18: #{tpu_custom_call.1} parent=1 // pred_check
      _
    $region19: #{tpu_custom_call.1} parent=1 // pred_check_branch
      %62 = sbr.rel (0) target = $region21
    $region20: #{tpu_custom_call.1} parent=1 // pred_region
      %s64 = ssub.s32 16, 16
      %65 = vsyncadd [#allocation9], %s64
      %s67 = sshll.u32 [#allocation10], 4
      %s68 = int_to_ptr.vmem [resolvable:$true] %s67
      %70 = dma.hbm_to_vmem [thread:$0]  %s4, 16, %s68, [#allocation9]
    $region21: #{tpu_custom_call.1} parent=1 // pred_fallthru
      _
    // Predicated region
    $region22: #{tpu_custom_call.1} parent=1 // pred_check
      _
    $region23: #{tpu_custom_call.1} parent=1 // pred_check_branch
      %72 = sbr.rel (0) target = $region25
    $region24: #{tpu_custom_call.1} parent=1 // pred_region
      %s74 = ssub.s32 2048, 2048
      %75 = vsyncadd [#allocation12], %s74
      %s76 = sshll.u32 [#allocation11], 4
      %s77 = int_to_ptr.vmem [resolvable:$true] %s76
      %82 = dma.hbm_to_vmem [thread:$0]  %s5, 2048, %s77, [#allocation12], 128, 128, 8
    $region25: #{tpu_custom_call.1} parent=1 // pred_fallthru
      _
    // Predicated region
    $region26: #{tpu_custom_call.1} parent=1 // pred_check
      _
    $region27: #{tpu_custom_call.1} parent=1 // pred_check_branch
      %84 = sbr.rel (0) target = $region29
    $region28: #{tpu_custom_call.1} parent=1 // pred_region
      %s86 = ssub.s32 16, 16
      %87 = vsyncadd [#allocation12], %s86
      %s89 = sshll.u32 [#allocation13], 4
      %s90 = int_to_ptr.vmem [resolvable:$true] %s89
      %92 = dma.hbm_to_vmem [thread:$0]  %s6, 16, %s90, [#allocation12]
    $region29: #{tpu_custom_call.1} parent=1 // pred_fallthru
      _
    // Predicated region
    $region30: #{tpu_custom_call.1} parent=1 // pred_check
      _
    $region31: #{tpu_custom_call.1} parent=1 // pred_check_branch
      %94 = sbr.rel (0) target = $region33
    $region32: #{tpu_custom_call.1} parent=1 // pred_region
      %95 = dma.done [#allocation3], 896
    $region33: #{tpu_custom_call.1} parent=1 // pred_fallthru
      _
    // Predicated region
    $region34: #{tpu_custom_call.1} parent=1 // pred_check
      _
    $region35: #{tpu_custom_call.1} parent=1 // pred_check_branch
      %97 = sbr.rel (0) target = $region37
    $region36: #{tpu_custom_call.1} parent=1 // pred_region
      %98 = dma.done [#allocation6], 43008
    $region37: #{tpu_custom_call.1} parent=1 // pred_fallthru
      _
    // Predicated region
    $region38: #{tpu_custom_call.1} parent=1 // pred_check
      _
    $region39: #{tpu_custom_call.1} parent=1 // pred_check_branch
      %100 = sbr.rel (0) target = $region41
    $region40: #{tpu_custom_call.1} parent=1 // pred_region
      %101 = dma.done [#allocation6], 48
    $region41: #{tpu_custom_call.1} parent=1 // pred_fallthru
      _
    // Predicated region
    $region42: #{tpu_custom_call.1} parent=1 // pred_check
      _
    $region43: #{tpu_custom_call.1} parent=1 // pred_check_branch
      %103 = sbr.rel (0) target = $region45
    $region44: #{tpu_custom_call.1} parent=1 // pred_region
      %104 = dma.done [#allocation9], 6144
    $region45: #{tpu_custom_call.1} parent=1 // pred_fallthru
      _
    // Predicated region
    $region46: #{tpu_custom_call.1} parent=1 // pred_check
      _
    $region47: #{tpu_custom_call.1} parent=1 // pred_check_branch
      %106 = sbr.rel (0) target = $region49
    $region48: #{tpu_custom_call.1} parent=1 // pred_region
      %107 = dma.done [#allocation9], 16
    $region49: #{tpu_custom_call.1} parent=1 // pred_fallthru
      _
    // Predicated region
    $region50: #{tpu_custom_call.1} parent=1 // pred_check
      _
    $region51: #{tpu_custom_call.1} parent=1 // pred_check_branch
      %109 = sbr.rel (0) target = $region53
    $region52: #{tpu_custom_call.1} parent=1 // pred_region
      %110 = dma.done [#allocation12], 2048
    $region53: #{tpu_custom_call.1} parent=1 // pred_fallthru
      _
    // Predicated region
    $region54: #{tpu_custom_call.1} parent=1 // pred_check
      _
    $region55: #{tpu_custom_call.1} parent=1 // pred_check_branch
      %112 = sbr.rel (0) target = $region57
    $region56: #{tpu_custom_call.1} parent=1 // pred_region
      %113 = dma.done [#allocation12], 16
    $region57: #{tpu_custom_call.1} parent=1 // pred_fallthru
      _
    %v114 = vld [vmem:[#allocation2] sm:$0xff]
    %v115 = vld [vmem:[#allocation2 + $0x8] sm:$0xff]
    %v116 = vld [vmem:[#allocation2 + $0x10] sm:$0xff]
    %v117 = vld [vmem:[#allocation2 + $0x18] sm:$0xff]
    %v118 = vld [vmem:[#allocation2 + $0x20] sm:$0xff]
    %v119 = vld [vmem:[#allocation2 + $0x28] sm:$0xff]
    %v120 = vld [vmem:[#allocation2 + $0x30] sm:$0xff]
    %v121 = vld [vmem:[#allocation5] sm:$0xff]
    %v122 = vld [vmem:[#allocation5 + $0x8] sm:$0xff]
    %v123 = vld [vmem:[#allocation5 + $0x10] sm:$0xff]
    %v124 = vld [vmem:[#allocation5 + $0x18] sm:$0xff]
    %v125 = vld [vmem:[#allocation5 + $0x20] sm:$0xff]
    %v126 = vld [vmem:[#allocation5 + $0x28] sm:$0xff]
    %v127 = vld [vmem:[#allocation5 + $0x30] sm:$0xff]
    %v128 = vld [vmem:[#allocation5 + $0x38] sm:$0xff]
    %v129 = vld [vmem:[#allocation5 + $0x40] sm:$0xff]
    %v130 = vld [vmem:[#allocation5 + $0x48] sm:$0xff]
    %v131 = vld [vmem:[#allocation5 + $0x50] sm:$0xff]
    %v132 = vld [vmem:[#allocation5 + $0x58] sm:$0xff]
    %v133 = vld [vmem:[#allocation5 + $0x60] sm:$0xff]
    %v134 = vld [vmem:[#allocation5 + $0x68] sm:$0xff]
    %v135 = vld [vmem:[#allocation5 + $0x70] sm:$0xff]
    %v136 = vld [vmem:[#allocation5 + $0x78] sm:$0xff]
    %v137 = vld [vmem:[#allocation5 + $0x80] sm:$0xff]
    %v138 = vld [vmem:[#allocation5 + $0x88] sm:$0xff]
    %v139 = vld [vmem:[#allocation5 + $0x90] sm:$0xff]
    %v140 = vld [vmem:[#allocation5 + $0x98] sm:$0xff]
    %v141 = vld [vmem:[#allocation5 + $0xa0] sm:$0xff]
    %v142 = vld [vmem:[#allocation5 + $0xa8] sm:$0xff]
    %v143 = vld [vmem:[#allocation5 + $0xb0] sm:$0xff]
    %v144 = vld [vmem:[#allocation5 + $0xb8] sm:$0xff]
    %v145 = vld [vmem:[#allocation5 + $0xc0] sm:$0xff]
    %v146 = vld [vmem:[#allocation5 + $0xc8] sm:$0xff]
    %v147 = vld [vmem:[#allocation5 + $0xd0] sm:$0xff]
    %v148 = vld [vmem:[#allocation5 + $0xd8] sm:$0xff]
    %v149 = vld [vmem:[#allocation5 + $0xe0] sm:$0xff]
    %v150 = vld [vmem:[#allocation5 + $0xe8] sm:$0xff]
    %v151 = vld [vmem:[#allocation5 + $0xf0] sm:$0xff]
    %v152 = vld [vmem:[#allocation5 + $0xf8] sm:$0xff]
    %v153 = vld [vmem:[#allocation5 + $0x100] sm:$0xff]
    %v154 = vld [vmem:[#allocation5 + $0x108] sm:$0xff]
    %v155 = vld [vmem:[#allocation5 + $0x110] sm:$0xff]
    %v156 = vld [vmem:[#allocation5 + $0x118] sm:$0xff]
    %v157 = vld [vmem:[#allocation5 + $0x120] sm:$0xff]
    %v158 = vld [vmem:[#allocation5 + $0x128] sm:$0xff]
    %v159 = vld [vmem:[#allocation5 + $0x130] sm:$0xff]
    %v160 = vld [vmem:[#allocation5 + $0x138] sm:$0xff]
    %v161 = vld [vmem:[#allocation5 + $0x140] sm:$0xff]
    %v162 = vld [vmem:[#allocation5 + $0x148] sm:$0xff]
    %v163 = vld [vmem:[#allocation5 + $0x150] sm:$0xff]
    %v164 = vld [vmem:[#allocation5 + $0x158] sm:$0xff]
    %v165 = vld [vmem:[#allocation5 + $0x160] sm:$0xff]
    %v166 = vld [vmem:[#allocation5 + $0x168] sm:$0xff]
    %v167 = vld [vmem:[#allocation5 + $0x170] sm:$0xff]
    %v168 = vld [vmem:[#allocation5 + $0x178] sm:$0xff]
    %v169 = vld [vmem:[#allocation5 + $0x180] sm:$0xff]
    %v170 = vld [vmem:[#allocation5 + $0x188] sm:$0xff]
    %v171 = vld [vmem:[#allocation5 + $0x190] sm:$0xff]
    %v172 = vld [vmem:[#allocation5 + $0x198] sm:$0xff]
    %v173 = vld [vmem:[#allocation5 + $0x1a0] sm:$0xff]
    %v174 = vld [vmem:[#allocation5 + $0x1a8] sm:$0xff]
    %v175 = vld [vmem:[#allocation5 + $0x1b0] sm:$0xff]
    %v176 = vld [vmem:[#allocation5 + $0x1b8] sm:$0xff]
    %v177 = vld [vmem:[#allocation5 + $0x1c0] sm:$0xff]
    %v178 = vld [vmem:[#allocation5 + $0x1c8] sm:$0xff]
    %v179 = vld [vmem:[#allocation5 + $0x1d0] sm:$0xff]
    %v180 = vld [vmem:[#allocation5 + $0x1d8] sm:$0xff]
    %v181 = vld [vmem:[#allocation5 + $0x1e0] sm:$0xff]
    %v182 = vld [vmem:[#allocation5 + $0x1e8] sm:$0xff]
    %v183 = vld [vmem:[#allocation5 + $0x1f0] sm:$0xff]
    %v184 = vld [vmem:[#allocation5 + $0x1f8] sm:$0xff]
    %v185 = vld [vmem:[#allocation5 + $0x200] sm:$0xff]
    %v186 = vld [vmem:[#allocation5 + $0x208] sm:$0xff]
    %v187 = vld [vmem:[#allocation5 + $0x210] sm:$0xff]
    %v188 = vld [vmem:[#allocation5 + $0x218] sm:$0xff]
    %v189 = vld [vmem:[#allocation5 + $0x220] sm:$0xff]
    %v190 = vld [vmem:[#allocation5 + $0x228] sm:$0xff]
    %v191 = vld [vmem:[#allocation5 + $0x230] sm:$0xff]
    %v192 = vld [vmem:[#allocation5 + $0x238] sm:$0xff]
    %v193 = vld [vmem:[#allocation5 + $0x240] sm:$0xff]
    %v194 = vld [vmem:[#allocation5 + $0x248] sm:$0xff]
    %v195 = vld [vmem:[#allocation5 + $0x250] sm:$0xff]
    %v196 = vld [vmem:[#allocation5 + $0x258] sm:$0xff]
    %v197 = vld [vmem:[#allocation5 + $0x260] sm:$0xff]
    %v198 = vld [vmem:[#allocation5 + $0x268] sm:$0xff]
    %v199 = vld [vmem:[#allocation5 + $0x270] sm:$0xff]
    %v200 = vld [vmem:[#allocation5 + $0x278] sm:$0xff]
    %v201 = vld [vmem:[#allocation5 + $0x280] sm:$0xff]
    %v202 = vld [vmem:[#allocation5 + $0x288] sm:$0xff]
    %v203 = vld [vmem:[#allocation5 + $0x290] sm:$0xff]
    %v204 = vld [vmem:[#allocation5 + $0x298] sm:$0xff]
    %v205 = vld [vmem:[#allocation5 + $0x2a0] sm:$0xff]
    %v206 = vld [vmem:[#allocation5 + $0x2a8] sm:$0xff]
    %v207 = vld [vmem:[#allocation5 + $0x2b0] sm:$0xff]
    %v208 = vld [vmem:[#allocation5 + $0x2b8] sm:$0xff]
    %v209 = vld [vmem:[#allocation5 + $0x2c0] sm:$0xff]
    %v210 = vld [vmem:[#allocation5 + $0x2c8] sm:$0xff]
    %v211 = vld [vmem:[#allocation5 + $0x2d0] sm:$0xff]
    %v212 = vld [vmem:[#allocation5 + $0x2d8] sm:$0xff]
    %v213 = vld [vmem:[#allocation5 + $0x2e0] sm:$0xff]
    %v214 = vld [vmem:[#allocation5 + $0x2e8] sm:$0xff]
    %v215 = vld [vmem:[#allocation5 + $0x2f0] sm:$0xff]
    %v216 = vld [vmem:[#allocation5 + $0x2f8] sm:$0xff]
    %v217 = vld [vmem:[#allocation5 + $0x300] sm:$0xff]
    %v218 = vld [vmem:[#allocation5 + $0x308] sm:$0xff]
    %v219 = vld [vmem:[#allocation5 + $0x310] sm:$0xff]
    %v220 = vld [vmem:[#allocation5 + $0x318] sm:$0xff]
    %v221 = vld [vmem:[#allocation5 + $0x320] sm:$0xff]
    %v222 = vld [vmem:[#allocation5 + $0x328] sm:$0xff]
    %v223 = vld [vmem:[#allocation5 + $0x330] sm:$0xff]
    %v224 = vld [vmem:[#allocation5 + $0x338] sm:$0xff]
    %v225 = vld [vmem:[#allocation5 + $0x340] sm:$0xff]
    %v226 = vld [vmem:[#allocation5 + $0x348] sm:$0xff]
    %v227 = vld [vmem:[#allocation5 + $0x350] sm:$0xff]
    %v228 = vld [vmem:[#allocation5 + $0x358] sm:$0xff]
    %v229 = vld [vmem:[#allocation5 + $0x360] sm:$0xff]
    %v230 = vld [vmem:[#allocation5 + $0x368] sm:$0xff]
    %v231 = vld [vmem:[#allocation5 + $0x370] sm:$0xff]
    %v232 = vld [vmem:[#allocation5 + $0x378] sm:$0xff]
    %v233 = vld [vmem:[#allocation5 + $0x380] sm:$0xff]
    %v234 = vld [vmem:[#allocation5 + $0x388] sm:$0xff]
    %v235 = vld [vmem:[#allocation5 + $0x390] sm:$0xff]
    %v236 = vld [vmem:[#allocation5 + $0x398] sm:$0xff]
    %v237 = vld [vmem:[#allocation5 + $0x3a0] sm:$0xff]
    %v238 = vld [vmem:[#allocation5 + $0x3a8] sm:$0xff]
    %v239 = vld [vmem:[#allocation5 + $0x3b0] sm:$0xff]
    %v240 = vld [vmem:[#allocation5 + $0x3b8] sm:$0xff]
    %v241 = vld [vmem:[#allocation5 + $0x3c0] sm:$0xff]
    %v242 = vld [vmem:[#allocation5 + $0x3c8] sm:$0xff]
    %v243 = vld [vmem:[#allocation5 + $0x3d0] sm:$0xff]
    %v244 = vld [vmem:[#allocation5 + $0x3d8] sm:$0xff]
    %v245 = vld [vmem:[#allocation5 + $0x3e0] sm:$0xff]
    %v246 = vld [vmem:[#allocation5 + $0x3e8] sm:$0xff]
    %v247 = vld [vmem:[#allocation5 + $0x3f0] sm:$0xff]
    %v248 = vld [vmem:[#allocation5 + $0x3f8] sm:$0xff]
    %v249 = vld [vmem:[#allocation5 + $0x400] sm:$0xff]
    %v250 = vld [vmem:[#allocation5 + $0x408] sm:$0xff]
    %v251 = vld [vmem:[#allocation5 + $0x410] sm:$0xff]
    %v252 = vld [vmem:[#allocation5 + $0x418] sm:$0xff]
    %v253 = vld [vmem:[#allocation5 + $0x420] sm:$0xff]
    %v254 = vld [vmem:[#allocation5 + $0x428] sm:$0xff]
    %v255 = vld [vmem:[#allocation5 + $0x430] sm:$0xff]
    %v256 = vld [vmem:[#allocation5 + $0x438] sm:$0xff]
    %v257 = vld [vmem:[#allocation5 + $0x440] sm:$0xff]
    %v258 = vld [vmem:[#allocation5 + $0x448] sm:$0xff]
    %v259 = vld [vmem:[#allocation5 + $0x450] sm:$0xff]
    %v260 = vld [vmem:[#allocation5 + $0x458] sm:$0xff]
    %v261 = vld [vmem:[#allocation5 + $0x460] sm:$0xff]
    %v262 = vld [vmem:[#allocation5 + $0x468] sm:$0xff]
    %v263 = vld [vmem:[#allocation5 + $0x470] sm:$0xff]
    %v264 = vld [vmem:[#allocation5 + $0x478] sm:$0xff]
    %v265 = vld [vmem:[#allocation5 + $0x480] sm:$0xff]
    %v266 = vld [vmem:[#allocation5 + $0x488] sm:$0xff]
    %v267 = vld [vmem:[#allocation5 + $0x490] sm:$0xff]
    %v268 = vld [vmem:[#allocation5 + $0x498] sm:$0xff]
    %v269 = vld [vmem:[#allocation5 + $0x4a0] sm:$0xff]
    %v270 = vld [vmem:[#allocation5 + $0x4a8] sm:$0xff]
    %v271 = vld [vmem:[#allocation5 + $0x4b0] sm:$0xff]
    %v272 = vld [vmem:[#allocation5 + $0x4b8] sm:$0xff]
    %v273 = vld [vmem:[#allocation5 + $0x4c0] sm:$0xff]
    %v274 = vld [vmem:[#allocation5 + $0x4c8] sm:$0xff]
    %v275 = vld [vmem:[#allocation5 + $0x4d0] sm:$0xff]
    %v276 = vld [vmem:[#allocation5 + $0x4d8] sm:$0xff]
    %v277 = vld [vmem:[#allocation5 + $0x4e0] sm:$0xff]
    %v278 = vld [vmem:[#allocation5 + $0x4e8] sm:$0xff]
    %v279 = vld [vmem:[#allocation5 + $0x4f0] sm:$0xff]
    %v280 = vld [vmem:[#allocation5 + $0x4f8] sm:$0xff]
    %v281 = vld [vmem:[#allocation5 + $0x500] sm:$0xff]
    %v282 = vld [vmem:[#allocation5 + $0x508] sm:$0xff]
    %v283 = vld [vmem:[#allocation5 + $0x510] sm:$0xff]
    %v284 = vld [vmem:[#allocation5 + $0x518] sm:$0xff]
    %v285 = vld [vmem:[#allocation5 + $0x520] sm:$0xff]
    %v286 = vld [vmem:[#allocation5 + $0x528] sm:$0xff]
    %v287 = vld [vmem:[#allocation5 + $0x530] sm:$0xff]
    %v288 = vld [vmem:[#allocation5 + $0x538] sm:$0xff]
    %v289 = vld [vmem:[#allocation5 + $0x540] sm:$0xff]
    %v290 = vld [vmem:[#allocation5 + $0x548] sm:$0xff]
    %v291 = vld [vmem:[#allocation5 + $0x550] sm:$0xff]
    %v292 = vld [vmem:[#allocation5 + $0x558] sm:$0xff]
    %v293 = vld [vmem:[#allocation5 + $0x560] sm:$0xff]
    %v294 = vld [vmem:[#allocation5 + $0x568] sm:$0xff]
    %v295 = vld [vmem:[#allocation5 + $0x570] sm:$0xff]
    %v296 = vld [vmem:[#allocation5 + $0x578] sm:$0xff]
    %v297 = vld [vmem:[#allocation5 + $0x580] sm:$0xff]
    %v298 = vld [vmem:[#allocation5 + $0x588] sm:$0xff]
    %v299 = vld [vmem:[#allocation5 + $0x590] sm:$0xff]
    %v300 = vld [vmem:[#allocation5 + $0x598] sm:$0xff]
    %v301 = vld [vmem:[#allocation5 + $0x5a0] sm:$0xff]
    %v302 = vld [vmem:[#allocation5 + $0x5a8] sm:$0xff]
    %v303 = vld [vmem:[#allocation5 + $0x5b0] sm:$0xff]
    %v304 = vld [vmem:[#allocation5 + $0x5b8] sm:$0xff]
    %v305 = vld [vmem:[#allocation5 + $0x5c0] sm:$0xff]
    %v306 = vld [vmem:[#allocation5 + $0x5c8] sm:$0xff]
    %v307 = vld [vmem:[#allocation5 + $0x5d0] sm:$0xff]
    %v308 = vld [vmem:[#allocation5 + $0x5d8] sm:$0xff]
    %v309 = vld [vmem:[#allocation5 + $0x5e0] sm:$0xff]
    %v310 = vld [vmem:[#allocation5 + $0x5e8] sm:$0xff]
    %v311 = vld [vmem:[#allocation5 + $0x5f0] sm:$0xff]
    %v312 = vld [vmem:[#allocation5 + $0x5f8] sm:$0xff]
    %v313 = vld [vmem:[#allocation5 + $0x600] sm:$0xff]
    %v314 = vld [vmem:[#allocation5 + $0x608] sm:$0xff]
    %v315 = vld [vmem:[#allocation5 + $0x610] sm:$0xff]
    %v316 = vld [vmem:[#allocation5 + $0x618] sm:$0xff]
    %v317 = vld [vmem:[#allocation5 + $0x620] sm:$0xff]
    %v318 = vld [vmem:[#allocation5 + $0x628] sm:$0xff]
    %v319 = vld [vmem:[#allocation5 + $0x630] sm:$0xff]
    %v320 = vld [vmem:[#allocation5 + $0x638] sm:$0xff]
    %v321 = vld [vmem:[#allocation5 + $0x640] sm:$0xff]
    %v322 = vld [vmem:[#allocation5 + $0x648] sm:$0xff]
    %v323 = vld [vmem:[#allocation5 + $0x650] sm:$0xff]
    %v324 = vld [vmem:[#allocation5 + $0x658] sm:$0xff]
    %v325 = vld [vmem:[#allocation5 + $0x660] sm:$0xff]
    %v326 = vld [vmem:[#allocation5 + $0x668] sm:$0xff]
    %v327 = vld [vmem:[#allocation5 + $0x670] sm:$0xff]
    %v328 = vld [vmem:[#allocation5 + $0x678] sm:$0xff]
    %v329 = vld [vmem:[#allocation5 + $0x680] sm:$0xff]
    %v330 = vld [vmem:[#allocation5 + $0x688] sm:$0xff]
    %v331 = vld [vmem:[#allocation5 + $0x690] sm:$0xff]
    %v332 = vld [vmem:[#allocation5 + $0x698] sm:$0xff]
    %v333 = vld [vmem:[#allocation5 + $0x6a0] sm:$0xff]
    %v334 = vld [vmem:[#allocation5 + $0x6a8] sm:$0xff]
    %v335 = vld [vmem:[#allocation5 + $0x6b0] sm:$0xff]
    %v336 = vld [vmem:[#allocation5 + $0x6b8] sm:$0xff]
    %v337 = vld [vmem:[#allocation5 + $0x6c0] sm:$0xff]
    %v338 = vld [vmem:[#allocation5 + $0x6c8] sm:$0xff]
    %v339 = vld [vmem:[#allocation5 + $0x6d0] sm:$0xff]
    %v340 = vld [vmem:[#allocation5 + $0x6d8] sm:$0xff]
    %v341 = vld [vmem:[#allocation5 + $0x6e0] sm:$0xff]
    %v342 = vld [vmem:[#allocation5 + $0x6e8] sm:$0xff]
    %v343 = vld [vmem:[#allocation5 + $0x6f0] sm:$0xff]
    %v344 = vld [vmem:[#allocation5 + $0x6f8] sm:$0xff]
    %v345 = vld [vmem:[#allocation5 + $0x700] sm:$0xff]
    %v346 = vld [vmem:[#allocation5 + $0x708] sm:$0xff]
    %v347 = vld [vmem:[#allocation5 + $0x710] sm:$0xff]
    %v348 = vld [vmem:[#allocation5 + $0x718] sm:$0xff]
    %v349 = vld [vmem:[#allocation5 + $0x720] sm:$0xff]
    %v350 = vld [vmem:[#allocation5 + $0x728] sm:$0xff]
    %v351 = vld [vmem:[#allocation5 + $0x730] sm:$0xff]
    %v352 = vld [vmem:[#allocation5 + $0x738] sm:$0xff]
    %v353 = vld [vmem:[#allocation5 + $0x740] sm:$0xff]
    %v354 = vld [vmem:[#allocation5 + $0x748] sm:$0xff]
    %v355 = vld [vmem:[#allocation5 + $0x750] sm:$0xff]
    %v356 = vld [vmem:[#allocation5 + $0x758] sm:$0xff]
    %v357 = vld [vmem:[#allocation5 + $0x760] sm:$0xff]
    %v358 = vld [vmem:[#allocation5 + $0x768] sm:$0xff]
    %v359 = vld [vmem:[#allocation5 + $0x770] sm:$0xff]
    %v360 = vld [vmem:[#allocation5 + $0x778] sm:$0xff]
    %v361 = vld [vmem:[#allocation5 + $0x780] sm:$0xff]
    %v362 = vld [vmem:[#allocation5 + $0x788] sm:$0xff]
    %v363 = vld [vmem:[#allocation5 + $0x790] sm:$0xff]
    %v364 = vld [vmem:[#allocation5 + $0x798] sm:$0xff]
    %v365 = vld [vmem:[#allocation5 + $0x7a0] sm:$0xff]
    %v366 = vld [vmem:[#allocation5 + $0x7a8] sm:$0xff]
    %v367 = vld [vmem:[#allocation5 + $0x7b0] sm:$0xff]
    %v368 = vld [vmem:[#allocation5 + $0x7b8] sm:$0xff]
    %v369 = vld [vmem:[#allocation5 + $0x7c0] sm:$0xff]
    %v370 = vld [vmem:[#allocation5 + $0x7c8] sm:$0xff]
    %v371 = vld [vmem:[#allocation5 + $0x7d0] sm:$0xff]
    %v372 = vld [vmem:[#allocation5 + $0x7d8] sm:$0xff]
    %v373 = vld [vmem:[#allocation5 + $0x7e0] sm:$0xff]
    %v374 = vld [vmem:[#allocation5 + $0x7e8] sm:$0xff]
    %v375 = vld [vmem:[#allocation5 + $0x7f0] sm:$0xff]
    %v376 = vld [vmem:[#allocation5 + $0x7f8] sm:$0xff]
    %v377 = vld [vmem:[#allocation5 + $0x800] sm:$0xff]
    %v378 = vld [vmem:[#allocation5 + $0x808] sm:$0xff]
    %v379 = vld [vmem:[#allocation5 + $0x810] sm:$0xff]
    %v380 = vld [vmem:[#allocation5 + $0x818] sm:$0xff]
    %v381 = vld [vmem:[#allocation5 + $0x820] sm:$0xff]
    %v382 = vld [vmem:[#allocation5 + $0x828] sm:$0xff]
    %v383 = vld [vmem:[#allocation5 + $0x830] sm:$0xff]
    %v384 = vld [vmem:[#allocation5 + $0x838] sm:$0xff]
    %v385 = vld [vmem:[#allocation5 + $0x840] sm:$0xff]
    %v386 = vld [vmem:[#allocation5 + $0x848] sm:$0xff]
    %v387 = vld [vmem:[#allocation5 + $0x850] sm:$0xff]
    %v388 = vld [vmem:[#allocation5 + $0x858] sm:$0xff]
    %v389 = vld [vmem:[#allocation5 + $0x860] sm:$0xff]
    %v390 = vld [vmem:[#allocation5 + $0x868] sm:$0xff]
    %v391 = vld [vmem:[#allocation5 + $0x870] sm:$0xff]
    %v392 = vld [vmem:[#allocation5 + $0x878] sm:$0xff]
    %v393 = vld [vmem:[#allocation5 + $0x880] sm:$0xff]
    %v394 = vld [vmem:[#allocation5 + $0x888] sm:$0xff]
    %v395 = vld [vmem:[#allocation5 + $0x890] sm:$0xff]
    %v396 = vld [vmem:[#allocation5 + $0x898] sm:$0xff]
    %v397 = vld [vmem:[#allocation5 + $0x8a0] sm:$0xff]
    %v398 = vld [vmem:[#allocation5 + $0x8a8] sm:$0xff]
    %v399 = vld [vmem:[#allocation5 + $0x8b0] sm:$0xff]
    %v400 = vld [vmem:[#allocation5 + $0x8b8] sm:$0xff]
    %v401 = vld [vmem:[#allocation5 + $0x8c0] sm:$0xff]
    %v402 = vld [vmem:[#allocation5 + $0x8c8] sm:$0xff]
    %v403 = vld [vmem:[#allocation5 + $0x8d0] sm:$0xff]
    %v404 = vld [vmem:[#allocation5 + $0x8d8] sm:$0xff]
    %v405 = vld [vmem:[#allocation5 + $0x8e0] sm:$0xff]
    %v406 = vld [vmem:[#allocation5 + $0x8e8] sm:$0xff]
    %v407 = vld [vmem:[#allocation5 + $0x8f0] sm:$0xff]
    %v408 = vld [vmem:[#allocation5 + $0x8f8] sm:$0xff]
    %v409 = vld [vmem:[#allocation5 + $0x900] sm:$0xff]
    %v410 = vld [vmem:[#allocation5 + $0x908] sm:$0xff]
    %v411 = vld [vmem:[#allocation5 + $0x910] sm:$0xff]
    %v412 = vld [vmem:[#allocation5 + $0x918] sm:$0xff]
    %v413 = vld [vmem:[#allocation5 + $0x920] sm:$0xff]
    %v414 = vld [vmem:[#allocation5 + $0x928] sm:$0xff]
    %v415 = vld [vmem:[#allocation5 + $0x930] sm:$0xff]
    %v416 = vld [vmem:[#allocation5 + $0x938] sm:$0xff]
    %v417 = vld [vmem:[#allocation5 + $0x940] sm:$0xff]
    %v418 = vld [vmem:[#allocation5 + $0x948] sm:$0xff]
    %v419 = vld [vmem:[#allocation5 + $0x950] sm:$0xff]
    %v420 = vld [vmem:[#allocation5 + $0x958] sm:$0xff]
    %v421 = vld [vmem:[#allocation5 + $0x960] sm:$0xff]
    %v422 = vld [vmem:[#allocation5 + $0x968] sm:$0xff]
    %v423 = vld [vmem:[#allocation5 + $0x970] sm:$0xff]
    %v424 = vld [vmem:[#allocation5 + $0x978] sm:$0xff]
    %v425 = vld [vmem:[#allocation5 + $0x980] sm:$0xff]
    %v426 = vld [vmem:[#allocation5 + $0x988] sm:$0xff]
    %v427 = vld [vmem:[#allocation5 + $0x990] sm:$0xff]
    %v428 = vld [vmem:[#allocation5 + $0x998] sm:$0xff]
    %v429 = vld [vmem:[#allocation5 + $0x9a0] sm:$0xff]
    %v430 = vld [vmem:[#allocation5 + $0x9a8] sm:$0xff]
    %v431 = vld [vmem:[#allocation5 + $0x9b0] sm:$0xff]
    %v432 = vld [vmem:[#allocation5 + $0x9b8] sm:$0xff]
    %v433 = vld [vmem:[#allocation5 + $0x9c0] sm:$0xff]
    %v434 = vld [vmem:[#allocation5 + $0x9c8] sm:$0xff]
    %v435 = vld [vmem:[#allocation5 + $0x9d0] sm:$0xff]
    %v436 = vld [vmem:[#allocation5 + $0x9d8] sm:$0xff]
    %v437 = vld [vmem:[#allocation5 + $0x9e0] sm:$0xff]
    %v438 = vld [vmem:[#allocation5 + $0x9e8] sm:$0xff]
    %v439 = vld [vmem:[#allocation5 + $0x9f0] sm:$0xff]
    %v440 = vld [vmem:[#allocation5 + $0x9f8] sm:$0xff]
    %v441 = vld [vmem:[#allocation5 + $0xa00] sm:$0xff]
    %v442 = vld [vmem:[#allocation5 + $0xa08] sm:$0xff]
    %v443 = vld [vmem:[#allocation5 + $0xa10] sm:$0xff]
    %v444 = vld [vmem:[#allocation5 + $0xa18] sm:$0xff]
    %v445 = vld [vmem:[#allocation5 + $0xa20] sm:$0xff]
    %v446 = vld [vmem:[#allocation5 + $0xa28] sm:$0xff]
    %v447 = vld [vmem:[#allocation5 + $0xa30] sm:$0xff]
    %v448 = vld [vmem:[#allocation5 + $0xa38] sm:$0xff]
    %v449 = vld [vmem:[#allocation5 + $0xa40] sm:$0xff]
    %v450 = vld [vmem:[#allocation5 + $0xa48] sm:$0xff]
    %v451 = vld [vmem:[#allocation5 + $0xa50] sm:$0xff]
    %v452 = vld [vmem:[#allocation5 + $0xa58] sm:$0xff]
    %v453 = vld [vmem:[#allocation5 + $0xa60] sm:$0xff]
    %v454 = vld [vmem:[#allocation5 + $0xa68] sm:$0xff]
    %v455 = vld [vmem:[#allocation5 + $0xa70] sm:$0xff]
    %v456 = vld [vmem:[#allocation5 + $0xa78] sm:$0xff]
    %v457 = vld [vmem:[#allocation7] sm:$0x7]
    %v459 = vlaneseq
    %v460 = vshrl.u32 %v459, 7
    %v461 = vsub.s32 0, %v460
    %v462 = vrot.slane %v457, %v461
    %v463 = vlaneseq
    %v464 = vshrl.u32 %v463, 7
    %v465 = vsub.s32 1, %v464
    %v466 = vrot.slane %v457, %v465
    %v467 = vlaneseq
    %v468 = vshrl.u32 %v467, 7
    %v469 = vsub.s32 2, %v468
    %v470 = vrot.slane %v457, %v469
    %474 = vmatprep.subr.mxu0 %v122
    %475 = vmatpush1.msra.mxu0 %v121
    %476 = vmatprep.subr.mxu0 %v125
    %477 = vmatpush1.msra.mxu0 %v124
    %478 = vmatprep.subr.mxu0 %v128
    %479 = vmatpush1.msra.mxu0 %v127
    %480 = vmatprep.subr.mxu0 %v131
    %481 = vmatpush1.msra.mxu0 %v130
    %482 = vmatprep.subr.mxu0 %v134
    %483 = vmatpush1.msra.mxu0 %v133
    %484 = vmatprep.subr.mxu0 %v137
    %485 = vmatpush1.msra.mxu0 %v136
    %486 = vmatprep.subr.mxu0 %v140
    %487 = vmatpush1.msra.mxu0 %v139
    %488 = vmatprep.subr.mxu0 %v143
    %489 = vmatpush1.msra.mxu0 %v142
    %490 = vmatprep.subr.mxu0 %v146
    %491 = vmatpush1.msra.mxu0 %v145
    %492 = vmatprep.subr.mxu0 %v149
    %493 = vmatpush1.msra.mxu0 %v148
    %494 = vmatprep.subr.mxu0 %v152
    %495 = vmatpush1.msra.mxu0 %v151
    %496 = vmatprep.subr.mxu0 %v155
    %497 = vmatpush1.msra.mxu0 %v154
    %498 = vmatprep.subr.mxu0 %v158
    %499 = vmatpush1.msra.mxu0 %v157
    %500 = vmatprep.subr.mxu0 %v161
    %501 = vmatpush1.msra.mxu0 %v160
    %502 = vmatprep.subr.mxu0 %v164
    %503 = vmatpush1.msra.mxu0 %v163
    %504 = vmatprep.subr.mxu0 %v167
    %505 = vmatpush1.msra.mxu0 %v166
    %506 = vmatprep.subr.mxu0 %v170
    %507 = vmatpush1.msra.mxu0 %v169
    %508 = vmatprep.subr.mxu0 %v173
    %509 = vmatpush1.msra.mxu0 %v172
    %510 = vmatprep.subr.mxu0 %v176
    %511 = vmatpush1.msra.mxu0 %v175
    %512 = vmatprep.subr.mxu0 %v179
    %513 = vmatpush1.msra.mxu0 %v178
    %514 = vmatprep.subr.mxu0 %v182
    %515 = vmatpush1.msra.mxu0 %v181
    %516 = vmatprep.subr.mxu0 %v185
    %517 = vmatpush1.msra.mxu0 %v184
    %518 = vmatprep.subr.mxu0 %v188
    %519 = vmatpush1.msra.mxu0 %v187
    %520 = vmatprep.subr.mxu0 %v191
    %521 = vmatpush1.msra.mxu0 %v190
    %522 = vmatprep.subr.mxu0 %v194
    %523 = vmatpush1.msra.mxu0 %v193
    %524 = vmatprep.subr.mxu0 %v197
    %525 = vmatpush1.msra.mxu0 %v196
    %526 = vmatprep.subr.mxu0 %v200
    %527 = vmatpush1.msra.mxu0 %v199
    %528 = vmatprep.subr.mxu0 %v203
    %529 = vmatpush1.msra.mxu0 %v202
    %530 = vmatprep.subr.mxu0 %v206
    %531 = vmatpush1.msra.mxu0 %v205
    %532 = vmatprep.subr.mxu0 %v209
    %533 = vmatpush1.msra.mxu0 %v208
    %534 = vmatprep.subr.mxu0 %v212
    %535 = vmatpush1.msra.mxu0 %v211
    %536 = vmatprep.subr.mxu0 %v215
    %537 = vmatpush1.msra.mxu0 %v214
    %538 = vmatprep.mubr.f32.mxu0 %v115
    %539 = vmatmul.mubr.f32.gmra.mrb[0].mxu0 %v114
    %v540 = vpop.f32.mrb[0].mxu0
    %v541 = vadd.f32 %v462, %v540
    %v542 = vpop.f32.mrb[0].mxu0
    %v543 = vadd.f32 %v466, %v542
    %544 = vdwg.mxu0
    %545 = vmatprep.subr.mxu0 %v218
    %546 = vmatpush1.msra.mxu0 %v217
    %547 = vmatprep.subr.mxu0 %v221
    %548 = vmatpush1.msra.mxu0 %v220
    %549 = vmatprep.subr.mxu0 %v224
    %550 = vmatpush1.msra.mxu0 %v223
    %551 = vmatprep.subr.mxu0 %v227
    %552 = vmatpush1.msra.mxu0 %v226
    %553 = vmatprep.subr.mxu0 %v230
    %554 = vmatpush1.msra.mxu0 %v229
    %555 = vmatprep.subr.mxu0 %v233
    %556 = vmatpush1.msra.mxu0 %v232
    %557 = vmatprep.subr.mxu0 %v236
    %558 = vmatpush1.msra.mxu0 %v235
    %559 = vmatprep.subr.mxu0 %v239
    %560 = vmatpush1.msra.mxu0 %v238
    %561 = vmatprep.subr.mxu0 %v242
    %562 = vmatpush1.msra.mxu0 %v241
    %563 = vmatprep.subr.mxu0 %v245
    %564 = vmatpush1.msra.mxu0 %v244
    %565 = vmatprep.subr.mxu0 %v248
    %566 = vmatpush1.msra.mxu0 %v247
    %567 = vmatprep.subr.mxu0 %v251
    %568 = vmatpush1.msra.mxu0 %v250
    %569 = vmatprep.subr.mxu0 %v254
    %570 = vmatpush1.msra.mxu0 %v253
    %571 = vmatprep.subr.mxu0 %v257
    %572 = vmatpush1.msra.mxu0 %v256
    %573 = vmatprep.subr.mxu0 %v260
    %574 = vmatpush1.msra.mxu0 %v259
    %575 = vmatprep.subr.mxu0 %v263
    %576 = vmatpush1.msra.mxu0 %v262
    %577 = vmatprep.subr.mxu0 %v266
    %578 = vmatpush1.msra.mxu0 %v265
    %579 = vmatprep.subr.mxu0 %v269
    %580 = vmatpush1.msra.mxu0 %v268
    %581 = vmatprep.subr.mxu0 %v272
    %582 = vmatpush1.msra.mxu0 %v271
    %583 = vmatprep.subr.mxu0 %v275
    %584 = vmatpush1.msra.mxu0 %v274
    %585 = vmatprep.subr.mxu0 %v278
    %586 = vmatpush1.msra.mxu0 %v277
    %587 = vmatprep.subr.mxu0 %v281
    %588 = vmatpush1.msra.mxu0 %v280
    %589 = vmatprep.subr.mxu0 %v284
    %590 = vmatpush1.msra.mxu0 %v283
    %591 = vmatprep.subr.mxu0 %v287
    %592 = vmatpush1.msra.mxu0 %v286
    %593 = vmatprep.subr.mxu0 %v290
    %594 = vmatpush1.msra.mxu0 %v289
    %595 = vmatprep.subr.mxu0 %v293
    %596 = vmatpush1.msra.mxu0 %v292
    %597 = vmatprep.subr.mxu0 %v296
    %598 = vmatpush1.msra.mxu0 %v295
    %599 = vmatprep.subr.mxu0 %v299
    %600 = vmatpush1.msra.mxu0 %v298
    %601 = vmatprep.subr.mxu0 %v302
    %602 = vmatpush1.msra.mxu0 %v301
    %603 = vmatprep.subr.mxu0 %v305
    %604 = vmatpush1.msra.mxu0 %v304
    %605 = vmatprep.subr.mxu0 %v308
    %606 = vmatpush1.msra.mxu0 %v307
    %607 = vmatprep.subr.mxu0 %v311
    %608 = vmatpush1.msra.mxu0 %v310
    %609 = vmatprep.mubr.f32.mxu0 %v117
    %610 = vmatmul.mubr.f32.gmra.mrb[0].mxu0 %v116
    %v611 = vpop.f32.mrb[0].mxu0
    %v612 = vadd.f32 %v541, %v611
    %v613 = vpop.f32.mrb[0].mxu0
    %v614 = vadd.f32 %v543, %v613
    %615 = vdwg.mxu0
    %616 = vmatprep.subr.mxu0 %v314
    %617 = vmatpush1.msra.mxu0 %v313
    %618 = vmatprep.subr.mxu0 %v317
    %619 = vmatpush1.msra.mxu0 %v316
    %620 = vmatprep.subr.mxu0 %v320
    %621 = vmatpush1.msra.mxu0 %v319
    %622 = vmatprep.subr.mxu0 %v323
    %623 = vmatpush1.msra.mxu0 %v322
    %624 = vmatprep.subr.mxu0 %v326
    %625 = vmatpush1.msra.mxu0 %v325
    %626 = vmatprep.subr.mxu0 %v329
    %627 = vmatpush1.msra.mxu0 %v328
    %628 = vmatprep.subr.mxu0 %v332
    %629 = vmatpush1.msra.mxu0 %v331
    %630 = vmatprep.subr.mxu0 %v335
    %631 = vmatpush1.msra.mxu0 %v334
    %632 = vmatprep.subr.mxu0 %v338
    %633 = vmatpush1.msra.mxu0 %v337
    %634 = vmatprep.subr.mxu0 %v341
    %635 = vmatpush1.msra.mxu0 %v340
    %636 = vmatprep.subr.mxu0 %v344
    %637 = vmatpush1.msra.mxu0 %v343
    %638 = vmatprep.subr.mxu0 %v347
    %639 = vmatpush1.msra.mxu0 %v346
    %640 = vmatprep.subr.mxu0 %v350
    %641 = vmatpush1.msra.mxu0 %v349
    %642 = vmatprep.subr.mxu0 %v353
    %643 = vmatpush1.msra.mxu0 %v352
    %644 = vmatprep.subr.mxu0 %v356
    %645 = vmatpush1.msra.mxu0 %v355
    %646 = vmatprep.subr.mxu0 %v359
    %647 = vmatpush1.msra.mxu0 %v358
    %648 = vmatprep.subr.mxu0 %v362
    %649 = vmatpush1.msra.mxu0 %v361
    %650 = vmatprep.subr.mxu0 %v365
    %651 = vmatpush1.msra.mxu0 %v364
    %652 = vmatprep.subr.mxu0 %v368
    %653 = vmatpush1.msra.mxu0 %v367
    %654 = vmatprep.subr.mxu0 %v371
    %655 = vmatpush1.msra.mxu0 %v370
    %656 = vmatprep.subr.mxu0 %v374
    %657 = vmatpush1.msra.mxu0 %v373
    %658 = vmatprep.subr.mxu0 %v377
    %659 = vmatpush1.msra.mxu0 %v376
    %660 = vmatprep.subr.mxu0 %v380
    %661 = vmatpush1.msra.mxu0 %v379
    %662 = vmatprep.subr.mxu0 %v383
    %663 = vmatpush1.msra.mxu0 %v382
    %664 = vmatprep.subr.mxu0 %v386
    %665 = vmatpush1.msra.mxu0 %v385
    %666 = vmatprep.subr.mxu0 %v389
    %667 = vmatpush1.msra.mxu0 %v388
    %668 = vmatprep.subr.mxu0 %v392
    %669 = vmatpush1.msra.mxu0 %v391
    %670 = vmatprep.subr.mxu0 %v395
    %671 = vmatpush1.msra.mxu0 %v394
    %672 = vmatprep.subr.mxu0 %v398
    %673 = vmatpush1.msra.mxu0 %v397
    %674 = vmatprep.subr.mxu0 %v401
    %675 = vmatpush1.msra.mxu0 %v400
    %676 = vmatprep.subr.mxu0 %v404
    %677 = vmatpush1.msra.mxu0 %v403
    %678 = vmatprep.subr.mxu0 %v407
    %679 = vmatpush1.msra.mxu0 %v406
    %680 = vmatprep.mubr.f32.mxu0 %v119
    %681 = vmatmul.mubr.f32.gmra.mrb[0].mxu0 %v118
    %v682 = vpop.f32.mrb[0].mxu0
    %v683 = vadd.f32 %v612, %v682
    %v684 = vpop.f32.mrb[0].mxu0
    %v685 = vadd.f32 %v614, %v684
    %686 = vdwg.mxu0
    %687 = vmatprep.subr.mxu0 %v410
    %688 = vmatpush1.msra.mxu0 %v409
    %689 = vmatprep.subr.mxu0 %v413
    %690 = vmatpush1.msra.mxu0 %v412
    %691 = vmatprep.subr.mxu0 %v416
    %692 = vmatpush1.msra.mxu0 %v415
    %693 = vmatprep.subr.mxu0 %v419
    %694 = vmatpush1.msra.mxu0 %v418
    %695 = vmatprep.subr.mxu0 %v422
    %696 = vmatpush1.msra.mxu0 %v421
    %697 = vmatprep.subr.mxu0 %v425
    %698 = vmatpush1.msra.mxu0 %v424
    %699 = vmatprep.subr.mxu0 %v428
    %700 = vmatpush1.msra.mxu0 %v427
    %701 = vmatprep.subr.mxu0 %v431
    %702 = vmatpush1.msra.mxu0 %v430
    %703 = vmatprep.subr.mxu0 %v434
    %704 = vmatpush1.msra.mxu0 %v433
    %705 = vmatprep.subr.mxu0 %v437
    %706 = vmatpush1.msra.mxu0 %v436
    %707 = vmatprep.subr.mxu0 %v440
    %708 = vmatpush1.msra.mxu0 %v439
    %709 = vmatprep.subr.mxu0 %v443
    %710 = vmatpush1.msra.mxu0 %v442
    %711 = vmatprep.subr.mxu0 %v446
    %712 = vmatpush1.msra.mxu0 %v445
    %713 = vmatprep.subr.mxu0 %v449
    %714 = vmatpush1.msra.mxu0 %v448
    %715 = vmatprep.subr.mxu0 %v452
    %716 = vmatpush1.msra.mxu0 %v451
    %717 = vmatprep.subr.mxu0 %v455
    %718 = vmatpush1.msra.mxu0 %v454
    %719 = vmatprep.subr.mxu0 0.0
    %720 = vmatpush1.msra.mxu0 0.0
    %721 = vmatprep.subr.mxu0 0.0
    %722 = vmatpush1.msra.mxu0 0.0
    %723 = vmatprep.subr.mxu0 0.0
    %724 = vmatpush1.msra.mxu0 0.0
    %725 = vmatprep.subr.mxu0 0.0
    %726 = vmatpush1.msra.mxu0 0.0
    %727 = vmatprep.subr.mxu0 0.0
    %728 = vmatpush1.msra.mxu0 0.0
    %729 = vmatprep.subr.mxu0 0.0
    %730 = vmatpush1.msra.mxu0 0.0
    %731 = vmatprep.subr.mxu0 0.0
    %732 = vmatpush1.msra.mxu0 0.0
    %733 = vmatprep.subr.mxu0 0.0
    %734 = vmatpush1.msra.mxu0 0.0
    %735 = vmatprep.subr.mxu0 0.0
    %736 = vmatpush1.msra.mxu0 0.0
    %737 = vmatprep.subr.mxu0 0.0
    %738 = vmatpush1.msra.mxu0 0.0
    %739 = vmatprep.subr.mxu0 0.0
    %740 = vmatpush1.msra.mxu0 0.0
    %741 = vmatprep.subr.mxu0 0.0
    %742 = vmatpush1.msra.mxu0 0.0
    %743 = vmatprep.subr.mxu0 0.0
    %744 = vmatpush1.msra.mxu0 0.0
    %745 = vmatprep.subr.mxu0 0.0
    %746 = vmatpush1.msra.mxu0 0.0
    %747 = vmatprep.subr.mxu0 0.0
    %748 = vmatpush1.msra.mxu0 0.0
    %749 = vmatprep.subr.mxu0 0.0
    %750 = vmatpush1.msra.mxu0 0.0
    %751 = vmatprep.mubr.f32.mxu0 0.0
    %752 = vmatmul.mubr.f32.gmra.mrb[0].mxu0 %v120
    %v753 = vpop.f32.mrb[0].mxu0
    %v754 = vadd.f32 %v683, %v753
    %v755 = vpop.f32.mrb[0].mxu0
    %v756 = vadd.f32 %v685, %v755
    %757 = vdwg.mxu0
    %758 = vmatprep.subr.mxu0 0.0
    %759 = vmatpush1.msra.mxu0 %v123
    %760 = vmatprep.subr.mxu0 0.0
    %761 = vmatpush1.msra.mxu0 %v126
    %762 = vmatprep.subr.mxu0 0.0
    %763 = vmatpush1.msra.mxu0 %v129
    %764 = vmatprep.subr.mxu0 0.0
    %765 = vmatpush1.msra.mxu0 %v132
    %766 = vmatprep.subr.mxu0 0.0
    %767 = vmatpush1.msra.mxu0 %v135
    %768 = vmatprep.subr.mxu0 0.0
    %769 = vmatpush1.msra.mxu0 %v138
    %770 = vmatprep.subr.mxu0 0.0
    %771 = vmatpush1.msra.mxu0 %v141
    %772 = vmatprep.subr.mxu0 0.0
    %773 = vmatpush1.msra.mxu0 %v144
    %774 = vmatprep.subr.mxu0 0.0
    %775 = vmatpush1.msra.mxu0 %v147
    %776 = vmatprep.subr.mxu0 0.0
    %777 = vmatpush1.msra.mxu0 %v150
    %778 = vmatprep.subr.mxu0 0.0
    %779 = vmatpush1.msra.mxu0 %v153
    %780 = vmatprep.subr.mxu0 0.0
    %781 = vmatpush1.msra.mxu0 %v156
    %782 = vmatprep.subr.mxu0 0.0
    %783 = vmatpush1.msra.mxu0 %v159
    %784 = vmatprep.subr.mxu0 0.0
    %785 = vmatpush1.msra.mxu0 %v162
    %786 = vmatprep.subr.mxu0 0.0
    %787 = vmatpush1.msra.mxu0 %v165
    %788 = vmatprep.subr.mxu0 0.0
    %789 = vmatpush1.msra.mxu0 %v168
    %790 = vmatprep.subr.mxu0 0.0
    %791 = vmatpush1.msra.mxu0 %v171
    %792 = vmatprep.subr.mxu0 0.0
    %793 = vmatpush1.msra.mxu0 %v174
    %794 = vmatprep.subr.mxu0 0.0
    %795 = vmatpush1.msra.mxu0 %v177
    %796 = vmatprep.subr.mxu0 0.0
    %797 = vmatpush1.msra.mxu0 %v180
    %798 = vmatprep.subr.mxu0 0.0
    %799 = vmatpush1.msra.mxu0 %v183
    %800 = vmatprep.subr.mxu0 0.0
    %801 = vmatpush1.msra.mxu0 %v186
    %802 = vmatprep.subr.mxu0 0.0
    %803 = vmatpush1.msra.mxu0 %v189
    %804 = vmatprep.subr.mxu0 0.0
    %805 = vmatpush1.msra.mxu0 %v192
    %806 = vmatprep.subr.mxu0 0.0
    %807 = vmatpush1.msra.mxu0 %v195
    %808 = vmatprep.subr.mxu0 0.0
    %809 = vmatpush1.msra.mxu0 %v198
    %810 = vmatprep.subr.mxu0 0.0
    %811 = vmatpush1.msra.mxu0 %v201
    %812 = vmatprep.subr.mxu0 0.0
    %813 = vmatpush1.msra.mxu0 %v204
    %814 = vmatprep.subr.mxu0 0.0
    %815 = vmatpush1.msra.mxu0 %v207
    %816 = vmatprep.subr.mxu0 0.0
    %817 = vmatpush1.msra.mxu0 %v210
    %818 = vmatprep.subr.mxu0 0.0
    %819 = vmatpush1.msra.mxu0 %v213
    %820 = vmatprep.subr.mxu0 0.0
    %821 = vmatpush1.msra.mxu0 %v216
    %822 = vmatprep.mubr.f32.mxu0 %v115
    %823 = vmatmul.mubr.f32.gmra.mrb[0].mxu0 %v114
    %v824 = vpop.f32.mrb[0].mxu0
    %v825 = vadd.f32 %v470, %v824
    %v826 = vpop.f32.mrb[0].mxu0
    %827 = vdwg.mxu0
    %828 = vmatprep.subr.mxu0 0.0
    %829 = vmatpush1.msra.mxu0 %v219
    %830 = vmatprep.subr.mxu0 0.0
    %831 = vmatpush1.msra.mxu0 %v222
    %832 = vmatprep.subr.mxu0 0.0
    %833 = vmatpush1.msra.mxu0 %v225
    %834 = vmatprep.subr.mxu0 0.0
    %835 = vmatpush1.msra.mxu0 %v228
    %836 = vmatprep.subr.mxu0 0.0
    %837 = vmatpush1.msra.mxu0 %v231
    %838 = vmatprep.subr.mxu0 0.0
    %839 = vmatpush1.msra.mxu0 %v234
    %840 = vmatprep.subr.mxu0 0.0
    %841 = vmatpush1.msra.mxu0 %v237
    %842 = vmatprep.subr.mxu0 0.0
    %843 = vmatpush1.msra.mxu0 %v240
    %844 = vmatprep.subr.mxu0 0.0
    %845 = vmatpush1.msra.mxu0 %v243
    %846 = vmatprep.subr.mxu0 0.0
    %847 = vmatpush1.msra.mxu0 %v246
    %848 = vmatprep.subr.mxu0 0.0
    %849 = vmatpush1.msra.mxu0 %v249
    %850 = vmatprep.subr.mxu0 0.0
    %851 = vmatpush1.msra.mxu0 %v252
    %852 = vmatprep.subr.mxu0 0.0
    %853 = vmatpush1.msra.mxu0 %v255
    %854 = vmatprep.subr.mxu0 0.0
    %855 = vmatpush1.msra.mxu0 %v258
    %856 = vmatprep.subr.mxu0 0.0
    %857 = vmatpush1.msra.mxu0 %v261
    %858 = vmatprep.subr.mxu0 0.0
    %859 = vmatpush1.msra.mxu0 %v264
    %860 = vmatprep.subr.mxu0 0.0
    %861 = vmatpush1.msra.mxu0 %v267
    %862 = vmatprep.subr.mxu0 0.0
    %863 = vmatpush1.msra.mxu0 %v270
    %864 = vmatprep.subr.mxu0 0.0
    %865 = vmatpush1.msra.mxu0 %v273
    %866 = vmatprep.subr.mxu0 0.0
    %867 = vmatpush1.msra.mxu0 %v276
    %868 = vmatprep.subr.mxu0 0.0
    %869 = vmatpush1.msra.mxu0 %v279
    %870 = vmatprep.subr.mxu0 0.0
    %871 = vmatpush1.msra.mxu0 %v282
    %872 = vmatprep.subr.mxu0 0.0
    %873 = vmatpush1.msra.mxu0 %v285
    %874 = vmatprep.subr.mxu0 0.0
    %875 = vmatpush1.msra.mxu0 %v288
    %876 = vmatprep.subr.mxu0 0.0
    %877 = vmatpush1.msra.mxu0 %v291
    %878 = vmatprep.subr.mxu0 0.0
    %879 = vmatpush1.msra.mxu0 %v294
    %880 = vmatprep.subr.mxu0 0.0
    %881 = vmatpush1.msra.mxu0 %v297
    %882 = vmatprep.subr.mxu0 0.0
    %883 = vmatpush1.msra.mxu0 %v300
    %884 = vmatprep.subr.mxu0 0.0
    %885 = vmatpush1.msra.mxu0 %v303
    %886 = vmatprep.subr.mxu0 0.0
    %887 = vmatpush1.msra.mxu0 %v306
    %888 = vmatprep.subr.mxu0 0.0
    %889 = vmatpush1.msra.mxu0 %v309
    %890 = vmatprep.subr.mxu0 0.0
    %891 = vmatpush1.msra.mxu0 %v312
    %892 = vmatprep.mubr.f32.mxu0 %v117
    %893 = vmatmul.mubr.f32.gmra.mrb[0].mxu0 %v116
    %v894 = vpop.f32.mrb[0].mxu0
    %v895 = vadd.f32 %v825, %v894
    %v896 = vpop.f32.mrb[0].mxu0
    %897 = vdwg.mxu0
    %898 = vmatprep.subr.mxu0 0.0
    %899 = vmatpush1.msra.mxu0 %v315
    %900 = vmatprep.subr.mxu0 0.0
    %901 = vmatpush1.msra.mxu0 %v318
    %902 = vmatprep.subr.mxu0 0.0
    %903 = vmatpush1.msra.mxu0 %v321
    %904 = vmatprep.subr.mxu0 0.0
    %905 = vmatpush1.msra.mxu0 %v324
    %906 = vmatprep.subr.mxu0 0.0
    %907 = vmatpush1.msra.mxu0 %v327
    %908 = vmatprep.subr.mxu0 0.0
    %909 = vmatpush1.msra.mxu0 %v330
    %910 = vmatprep.subr.mxu0 0.0
    %911 = vmatpush1.msra.mxu0 %v333
    %912 = vmatprep.subr.mxu0 0.0
    %913 = vmatpush1.msra.mxu0 %v336
    %914 = vmatprep.subr.mxu0 0.0
    %915 = vmatpush1.msra.mxu0 %v339
    %916 = vmatprep.subr.mxu0 0.0
    %917 = vmatpush1.msra.mxu0 %v342
    %918 = vmatprep.subr.mxu0 0.0
    %919 = vmatpush1.msra.mxu0 %v345
    %920 = vmatprep.subr.mxu0 0.0
    %921 = vmatpush1.msra.mxu0 %v348
    %922 = vmatprep.subr.mxu0 0.0
    %923 = vmatpush1.msra.mxu0 %v351
    %924 = vmatprep.subr.mxu0 0.0
    %925 = vmatpush1.msra.mxu0 %v354
    %926 = vmatprep.subr.mxu0 0.0
    %927 = vmatpush1.msra.mxu0 %v357
    %928 = vmatprep.subr.mxu0 0.0
    %929 = vmatpush1.msra.mxu0 %v360
    %930 = vmatprep.subr.mxu0 0.0
    %931 = vmatpush1.msra.mxu0 %v363
    %932 = vmatprep.subr.mxu0 0.0
    %933 = vmatpush1.msra.mxu0 %v366
    %934 = vmatprep.subr.mxu0 0.0
    %935 = vmatpush1.msra.mxu0 %v369
    %936 = vmatprep.subr.mxu0 0.0
    %937 = vmatpush1.msra.mxu0 %v372
    %938 = vmatprep.subr.mxu0 0.0
    %939 = vmatpush1.msra.mxu0 %v375
    %940 = vmatprep.subr.mxu0 0.0
    %941 = vmatpush1.msra.mxu0 %v378
    %942 = vmatprep.subr.mxu0 0.0
    %943 = vmatpush1.msra.mxu0 %v381
    %944 = vmatprep.subr.mxu0 0.0
    %945 = vmatpush1.msra.mxu0 %v384
    %946 = vmatprep.subr.mxu0 0.0
    %947 = vmatpush1.msra.mxu0 %v387
    %948 = vmatprep.subr.mxu0 0.0
    %949 = vmatpush1.msra.mxu0 %v390
    %950 = vmatprep.subr.mxu0 0.0
    %951 = vmatpush1.msra.mxu0 %v393
    %952 = vmatprep.subr.mxu0 0.0
    %953 = vmatpush1.msra.mxu0 %v396
    %954 = vmatprep.subr.mxu0 0.0
    %955 = vmatpush1.msra.mxu0 %v399
    %956 = vmatprep.subr.mxu0 0.0
    %957 = vmatpush1.msra.mxu0 %v402
    %958 = vmatprep.subr.mxu0 0.0
    %959 = vmatpush1.msra.mxu0 %v405
    %960 = vmatprep.subr.mxu0 0.0
    %961 = vmatpush1.msra.mxu0 %v408
    %962 = vmatprep.mubr.f32.mxu0 %v119
    %963 = vmatmul.mubr.f32.gmra.mrb[0].mxu0 %v118
    %v964 = vpop.f32.mrb[0].mxu0
    %v965 = vadd.f32 %v895, %v964
    %v966 = vpop.f32.mrb[0].mxu0
    %967 = vdwg.mxu0
    %968 = vmatprep.subr.mxu0 0.0
    %969 = vmatpush1.msra.mxu0 %v411
    %970 = vmatprep.subr.mxu0 0.0
    %971 = vmatpush1.msra.mxu0 %v414
    %972 = vmatprep.subr.mxu0 0.0
    %973 = vmatpush1.msra.mxu0 %v417
    %974 = vmatprep.subr.mxu0 0.0
    %975 = vmatpush1.msra.mxu0 %v420
    %976 = vmatprep.subr.mxu0 0.0
    %977 = vmatpush1.msra.mxu0 %v423
    %978 = vmatprep.subr.mxu0 0.0
    %979 = vmatpush1.msra.mxu0 %v426
    %980 = vmatprep.subr.mxu0 0.0
    %981 = vmatpush1.msra.mxu0 %v429
    %982 = vmatprep.subr.mxu0 0.0
    %983 = vmatpush1.msra.mxu0 %v432
    %984 = vmatprep.subr.mxu0 0.0
    %985 = vmatpush1.msra.mxu0 %v435
    %986 = vmatprep.subr.mxu0 0.0
    %987 = vmatpush1.msra.mxu0 %v438
    %988 = vmatprep.subr.mxu0 0.0
    %989 = vmatpush1.msra.mxu0 %v441
    %990 = vmatprep.subr.mxu0 0.0
    %991 = vmatpush1.msra.mxu0 %v444
    %992 = vmatprep.subr.mxu0 0.0
    %993 = vmatpush1.msra.mxu0 %v447
    %994 = vmatprep.subr.mxu0 0.0
    %995 = vmatpush1.msra.mxu0 %v450
    %996 = vmatprep.subr.mxu0 0.0
    %997 = vmatpush1.msra.mxu0 %v453
    %998 = vmatprep.subr.mxu0 0.0
    %999 = vmatpush1.msra.mxu0 %v456
    %1000 = vmatprep.subr.mxu0 0.0
    %1001 = vmatpush1.msra.mxu0 0.0
    %1002 = vmatprep.subr.mxu0 0.0
    %1003 = vmatpush1.msra.mxu0 0.0
    %1004 = vmatprep.subr.mxu0 0.0
    %1005 = vmatpush1.msra.mxu0 0.0
    %1006 = vmatprep.subr.mxu0 0.0
    %1007 = vmatpush1.msra.mxu0 0.0
    %1008 = vmatprep.subr.mxu0 0.0
    %1009 = vmatpush1.msra.mxu0 0.0
    %1010 = vmatprep.subr.mxu0 0.0
    %1011 = vmatpush1.msra.mxu0 0.0
    %1012 = vmatprep.subr.mxu0 0.0
    %1013 = vmatpush1.msra.mxu0 0.0
    %1014 = vmatprep.subr.mxu0 0.0
    %1015 = vmatpush1.msra.mxu0 0.0
    %1016 = vmatprep.subr.mxu0 0.0
    %1017 = vmatpush1.msra.mxu0 0.0
    %1018 = vmatprep.subr.mxu0 0.0
    %1019 = vmatpush1.msra.mxu0 0.0
    %1020 = vmatprep.subr.mxu0 0.0
    %1021 = vmatpush1.msra.mxu0 0.0
    %1022 = vmatprep.subr.mxu0 0.0
    %1023 = vmatpush1.msra.mxu0 0.0
    %1024 = vmatprep.subr.mxu0 0.0
    %1025 = vmatpush1.msra.mxu0 0.0
    %1026 = vmatprep.subr.mxu0 0.0
    %1027 = vmatpush1.msra.mxu0 0.0
    %1028 = vmatprep.subr.mxu0 0.0
    %1029 = vmatpush1.msra.mxu0 0.0
    %1030 = vmatprep.subr.mxu0 0.0
    %1031 = vmatpush1.msra.mxu0 0.0
    %1032 = vmatprep.mubr.f32.mxu0 0.0
    %1033 = vmatmul.mubr.f32.gmra.mrb[0].mxu0 %v120
    %v1034 = vpop.f32.mrb[0].mxu0
    %v1035 = vadd.f32 %v965, %v1034
    %v1036 = vpop.f32.mrb[0].mxu0
    %1037 = vdwg.mxu0
    %v1038 = vmax.f32 %v754, 0.0
    %v1039 = vmax.f32 %v756, 0.0
    %v1040 = vmax.f32 %v1035, 0.0
    %v1041 = vld [vmem:[#allocation8] sm:$0xff]
    %v1042 = vld [vmem:[#allocation8 + $0x8] sm:$0xff]
    %v1043 = vld [vmem:[#allocation8 + $0x10] sm:$0xff]
    %v1044 = vld [vmem:[#allocation8 + $0x18] sm:$0xff]
    %v1045 = vld [vmem:[#allocation8 + $0x20] sm:$0xff]
    %v1046 = vld [vmem:[#allocation8 + $0x28] sm:$0xff]
    %v1047 = vld [vmem:[#allocation8 + $0x30] sm:$0xff]
    %v1048 = vld [vmem:[#allocation8 + $0x38] sm:$0xff]
    %v1049 = vld [vmem:[#allocation8 + $0x40] sm:$0xff]
    %v1050 = vld [vmem:[#allocation8 + $0x48] sm:$0xff]
    %v1051 = vld [vmem:[#allocation8 + $0x50] sm:$0xff]
    %v1052 = vld [vmem:[#allocation8 + $0x58] sm:$0xff]
    %v1053 = vld [vmem:[#allocation8 + $0x60] sm:$0xff]
    %v1054 = vld [vmem:[#allocation8 + $0x68] sm:$0xff]
    %v1055 = vld [vmem:[#allocation8 + $0x70] sm:$0xff]
    %v1056 = vld [vmem:[#allocation8 + $0x78] sm:$0xff]
    %v1057 = vld [vmem:[#allocation8 + $0x80] sm:$0xff]
    %v1058 = vld [vmem:[#allocation8 + $0x88] sm:$0xff]
    %v1059 = vld [vmem:[#allocation8 + $0x90] sm:$0xff]
    %v1060 = vld [vmem:[#allocation8 + $0x98] sm:$0xff]
    %v1061 = vld [vmem:[#allocation8 + $0xa0] sm:$0xff]
    %v1062 = vld [vmem:[#allocation8 + $0xa8] sm:$0xff]
    %v1063 = vld [vmem:[#allocation8 + $0xb0] sm:$0xff]
    %v1064 = vld [vmem:[#allocation8 + $0xb8] sm:$0xff]
    %v1065 = vld [vmem:[#allocation8 + $0xc0] sm:$0xff]
    %v1066 = vld [vmem:[#allocation8 + $0xc8] sm:$0xff]
    %v1067 = vld [vmem:[#allocation8 + $0xd0] sm:$0xff]
    %v1068 = vld [vmem:[#allocation8 + $0xd8] sm:$0xff]
    %v1069 = vld [vmem:[#allocation8 + $0xe0] sm:$0xff]
    %v1070 = vld [vmem:[#allocation8 + $0xe8] sm:$0xff]
    %v1071 = vld [vmem:[#allocation8 + $0xf0] sm:$0xff]
    %v1072 = vld [vmem:[#allocation8 + $0xf8] sm:$0xff]
    %v1073 = vld [vmem:[#allocation8 + $0x100] sm:$0xff]
    %v1074 = vld [vmem:[#allocation8 + $0x108] sm:$0xff]
    %v1075 = vld [vmem:[#allocation8 + $0x110] sm:$0xff]
    %v1076 = vld [vmem:[#allocation8 + $0x118] sm:$0xff]
    %v1077 = vld [vmem:[#allocation8 + $0x120] sm:$0xff]
    %v1078 = vld [vmem:[#allocation8 + $0x128] sm:$0xff]
    %v1079 = vld [vmem:[#allocation8 + $0x130] sm:$0xff]
    %v1080 = vld [vmem:[#allocation8 + $0x138] sm:$0xff]
    %v1081 = vld [vmem:[#allocation8 + $0x140] sm:$0xff]
    %v1082 = vld [vmem:[#allocation8 + $0x148] sm:$0xff]
    %v1083 = vld [vmem:[#allocation8 + $0x150] sm:$0xff]
    %v1084 = vld [vmem:[#allocation8 + $0x158] sm:$0xff]
    %v1085 = vld [vmem:[#allocation8 + $0x160] sm:$0xff]
    %v1086 = vld [vmem:[#allocation8 + $0x168] sm:$0xff]
    %v1087 = vld [vmem:[#allocation8 + $0x170] sm:$0xff]
    %v1088 = vld [vmem:[#allocation8 + $0x178] sm:$0xff]
    %v1089 = vld [vmem:[#allocation10] sm:$0x1]
    %v1091 = vlaneseq
    %v1092 = vshrl.u32 %v1091, 7
    %v1093 = vsub.s32 0, %v1092
    %v1094 = vrot.slane %v1089, %v1093
    %1096 = vmatprep.subr.mxu0 0.0
    %1097 = vmatpush1.msra.mxu0 %v1041
    %1098 = vmatprep.subr.mxu0 0.0
    %1099 = vmatpush1.msra.mxu0 %v1042
    %1100 = vmatprep.subr.mxu0 0.0
    %1101 = vmatpush1.msra.mxu0 %v1043
    %1102 = vmatprep.subr.mxu0 0.0
    %1103 = vmatpush1.msra.mxu0 %v1044
    %1104 = vmatprep.subr.mxu0 0.0
    %1105 = vmatpush1.msra.mxu0 %v1045
    %1106 = vmatprep.subr.mxu0 0.0
    %1107 = vmatpush1.msra.mxu0 %v1046
    %1108 = vmatprep.subr.mxu0 0.0
    %1109 = vmatpush1.msra.mxu0 %v1047
    %1110 = vmatprep.subr.mxu0 0.0
    %1111 = vmatpush1.msra.mxu0 %v1048
    %1112 = vmatprep.subr.mxu0 0.0
    %1113 = vmatpush1.msra.mxu0 %v1049
    %1114 = vmatprep.subr.mxu0 0.0
    %1115 = vmatpush1.msra.mxu0 %v1050
    %1116 = vmatprep.subr.mxu0 0.0
    %1117 = vmatpush1.msra.mxu0 %v1051
    %1118 = vmatprep.subr.mxu0 0.0
    %1119 = vmatpush1.msra.mxu0 %v1052
    %1120 = vmatprep.subr.mxu0 0.0
    %1121 = vmatpush1.msra.mxu0 %v1053
    %1122 = vmatprep.subr.mxu0 0.0
    %1123 = vmatpush1.msra.mxu0 %v1054
    %1124 = vmatprep.subr.mxu0 0.0
    %1125 = vmatpush1.msra.mxu0 %v1055
    %1126 = vmatprep.subr.mxu0 0.0
    %1127 = vmatpush1.msra.mxu0 %v1056
    %1128 = vmatprep.subr.mxu0 0.0
    %1129 = vmatpush1.msra.mxu0 %v1057
    %1130 = vmatprep.subr.mxu0 0.0
    %1131 = vmatpush1.msra.mxu0 %v1058
    %1132 = vmatprep.subr.mxu0 0.0
    %1133 = vmatpush1.msra.mxu0 %v1059
    %1134 = vmatprep.subr.mxu0 0.0
    %1135 = vmatpush1.msra.mxu0 %v1060
    %1136 = vmatprep.subr.mxu0 0.0
    %1137 = vmatpush1.msra.mxu0 %v1061
    %1138 = vmatprep.subr.mxu0 0.0
    %1139 = vmatpush1.msra.mxu0 %v1062
    %1140 = vmatprep.subr.mxu0 0.0
    %1141 = vmatpush1.msra.mxu0 %v1063
    %1142 = vmatprep.subr.mxu0 0.0
    %1143 = vmatpush1.msra.mxu0 %v1064
    %1144 = vmatprep.subr.mxu0 0.0
    %1145 = vmatpush1.msra.mxu0 %v1065
    %1146 = vmatprep.subr.mxu0 0.0
    %1147 = vmatpush1.msra.mxu0 %v1066
    %1148 = vmatprep.subr.mxu0 0.0
    %1149 = vmatpush1.msra.mxu0 %v1067
    %1150 = vmatprep.subr.mxu0 0.0
    %1151 = vmatpush1.msra.mxu0 %v1068
    %1152 = vmatprep.subr.mxu0 0.0
    %1153 = vmatpush1.msra.mxu0 %v1069
    %1154 = vmatprep.subr.mxu0 0.0
    %1155 = vmatpush1.msra.mxu0 %v1070
    %1156 = vmatprep.subr.mxu0 0.0
    %1157 = vmatpush1.msra.mxu0 %v1071
    %1158 = vmatprep.subr.mxu0 0.0
    %1159 = vmatpush1.msra.mxu0 %v1072
    %1160 = vmatprep.mubr.f32.mxu0 %v1039
    %1161 = vmatmul.mubr.f32.gmra.mrb[0].mxu0 %v1038
    %v1162 = vpop.f32.mrb[0].mxu0
    %v1163 = vadd.f32 %v1094, %v1162
    %v1164 = vpop.f32.mrb[0].mxu0
    %1165 = vdwg.mxu0
    %1166 = vmatprep.subr.mxu0 0.0
    %1167 = vmatpush1.msra.mxu0 %v1073
    %1168 = vmatprep.subr.mxu0 0.0
    %1169 = vmatpush1.msra.mxu0 %v1074
    %1170 = vmatprep.subr.mxu0 0.0
    %1171 = vmatpush1.msra.mxu0 %v1075
    %1172 = vmatprep.subr.mxu0 0.0
    %1173 = vmatpush1.msra.mxu0 %v1076
    %1174 = vmatprep.subr.mxu0 0.0
    %1175 = vmatpush1.msra.mxu0 %v1077
    %1176 = vmatprep.subr.mxu0 0.0
    %1177 = vmatpush1.msra.mxu0 %v1078
    %1178 = vmatprep.subr.mxu0 0.0
    %1179 = vmatpush1.msra.mxu0 %v1079
    %1180 = vmatprep.subr.mxu0 0.0
    %1181 = vmatpush1.msra.mxu0 %v1080
    %1182 = vmatprep.subr.mxu0 0.0
    %1183 = vmatpush1.msra.mxu0 %v1081
    %1184 = vmatprep.subr.mxu0 0.0
    %1185 = vmatpush1.msra.mxu0 %v1082
    %1186 = vmatprep.subr.mxu0 0.0
    %1187 = vmatpush1.msra.mxu0 %v1083
    %1188 = vmatprep.subr.mxu0 0.0
    %1189 = vmatpush1.msra.mxu0 %v1084
    %1190 = vmatprep.subr.mxu0 0.0
    %1191 = vmatpush1.msra.mxu0 %v1085
    %1192 = vmatprep.subr.mxu0 0.0
    %1193 = vmatpush1.msra.mxu0 %v1086
    %1194 = vmatprep.subr.mxu0 0.0
    %1195 = vmatpush1.msra.mxu0 %v1087
    %1196 = vmatprep.subr.mxu0 0.0
    %1197 = vmatpush1.msra.mxu0 %v1088
    %1198 = vmatprep.subr.mxu0 0.0
    %1199 = vmatpush1.msra.mxu0 0.0
    %1200 = vmatprep.subr.mxu0 0.0
    %1201 = vmatpush1.msra.mxu0 0.0
    %1202 = vmatprep.subr.mxu0 0.0
    %1203 = vmatpush1.msra.mxu0 0.0
    %1204 = vmatprep.subr.mxu0 0.0
    %1205 = vmatpush1.msra.mxu0 0.0
    %1206 = vmatprep.subr.mxu0 0.0
    %1207 = vmatpush1.msra.mxu0 0.0
    %1208 = vmatprep.subr.mxu0 0.0
    %1209 = vmatpush1.msra.mxu0 0.0
    %1210 = vmatprep.subr.mxu0 0.0
    %1211 = vmatpush1.msra.mxu0 0.0
    %1212 = vmatprep.subr.mxu0 0.0
    %1213 = vmatpush1.msra.mxu0 0.0
    %1214 = vmatprep.subr.mxu0 0.0
    %1215 = vmatpush1.msra.mxu0 0.0
    %1216 = vmatprep.subr.mxu0 0.0
    %1217 = vmatpush1.msra.mxu0 0.0
    %1218 = vmatprep.subr.mxu0 0.0
    %1219 = vmatpush1.msra.mxu0 0.0
    %1220 = vmatprep.subr.mxu0 0.0
    %1221 = vmatpush1.msra.mxu0 0.0
    %1222 = vmatprep.subr.mxu0 0.0
    %1223 = vmatpush1.msra.mxu0 0.0
    %1224 = vmatprep.subr.mxu0 0.0
    %1225 = vmatpush1.msra.mxu0 0.0
    %1226 = vmatprep.subr.mxu0 0.0
    %1227 = vmatpush1.msra.mxu0 0.0
    %1228 = vmatprep.subr.mxu0 0.0
    %1229 = vmatpush1.msra.mxu0 0.0
    %1230 = vmatprep.mubr.f32.mxu0 0.0
    %1231 = vmatmul.mubr.f32.gmra.mrb[0].mxu0 %v1040
    %v1232 = vpop.f32.mrb[0].mxu0
    %v1233 = vadd.f32 %v1163, %v1232
    %v1234 = vpop.f32.mrb[0].mxu0
    %1235 = vdwg.mxu0
    %v1236 = vmax.f32 %v1233, 0.0
    %v1237 = vld [vmem:[#allocation11] sm:$0xff]
    %v1238 = vld [vmem:[#allocation11 + $0x8] sm:$0xff]
    %v1239 = vld [vmem:[#allocation11 + $0x10] sm:$0xff]
    %v1240 = vld [vmem:[#allocation11 + $0x18] sm:$0xff]
    %v1241 = vld [vmem:[#allocation11 + $0x20] sm:$0xff]
    %v1242 = vld [vmem:[#allocation11 + $0x28] sm:$0xff]
    %v1243 = vld [vmem:[#allocation11 + $0x30] sm:$0xff]
    %v1244 = vld [vmem:[#allocation11 + $0x38] sm:$0xff]
    %v1245 = vld [vmem:[#allocation11 + $0x40] sm:$0xff]
    %v1246 = vld [vmem:[#allocation11 + $0x48] sm:$0xff]
    %v1247 = vld [vmem:[#allocation11 + $0x50] sm:$0xff]
    %v1248 = vld [vmem:[#allocation11 + $0x58] sm:$0xff]
    %v1249 = vld [vmem:[#allocation11 + $0x60] sm:$0xff]
    %v1250 = vld [vmem:[#allocation11 + $0x68] sm:$0xff]
    %v1251 = vld [vmem:[#allocation11 + $0x70] sm:$0xff]
    %v1252 = vld [vmem:[#allocation11 + $0x78] sm:$0xff]
    %v1253 = vld [vmem:[#allocation13] sm:$0x1]
    %v1255 = vlaneseq
    %v1256 = vshrl.u32 %v1255, 7
    %v1257 = vsub.s32 0, %v1256
    %v1258 = vrot.slane %v1253, %v1257
    %1260 = vmatprep.subr.mxu0 0.0
    %1261 = vmatpush1.msra.mxu0 %v1237
    %1262 = vmatprep.subr.mxu0 0.0
    %1263 = vmatpush1.msra.mxu0 %v1238
    %1264 = vmatprep.subr.mxu0 0.0
    %1265 = vmatpush1.msra.mxu0 %v1239
    %1266 = vmatprep.subr.mxu0 0.0
    %1267 = vmatpush1.msra.mxu0 %v1240
    %1268 = vmatprep.subr.mxu0 0.0
    %1269 = vmatpush1.msra.mxu0 %v1241
    %1270 = vmatprep.subr.mxu0 0.0
    %1271 = vmatpush1.msra.mxu0 %v1242
    %1272 = vmatprep.subr.mxu0 0.0
    %1273 = vmatpush1.msra.mxu0 %v1243
    %1274 = vmatprep.subr.mxu0 0.0
    %1275 = vmatpush1.msra.mxu0 %v1244
    %1276 = vmatprep.subr.mxu0 0.0
    %1277 = vmatpush1.msra.mxu0 %v1245
    %1278 = vmatprep.subr.mxu0 0.0
    %1279 = vmatpush1.msra.mxu0 %v1246
    %1280 = vmatprep.subr.mxu0 0.0
    %1281 = vmatpush1.msra.mxu0 %v1247
    %1282 = vmatprep.subr.mxu0 0.0
    %1283 = vmatpush1.msra.mxu0 %v1248
    %1284 = vmatprep.subr.mxu0 0.0
    %1285 = vmatpush1.msra.mxu0 %v1249
    %1286 = vmatprep.subr.mxu0 0.0
    %1287 = vmatpush1.msra.mxu0 %v1250
    %1288 = vmatprep.subr.mxu0 0.0
    %1289 = vmatpush1.msra.mxu0 %v1251
    %1290 = vmatprep.subr.mxu0 0.0
    %1291 = vmatpush1.msra.mxu0 %v1252
    %1292 = vmatprep.subr.mxu0 0.0
    %1293 = vmatpush1.msra.mxu0 0.0
    %1294 = vmatprep.subr.mxu0 0.0
    %1295 = vmatpush1.msra.mxu0 0.0
    %1296 = vmatprep.subr.mxu0 0.0
    %1297 = vmatpush1.msra.mxu0 0.0
    %1298 = vmatprep.subr.mxu0 0.0
    %1299 = vmatpush1.msra.mxu0 0.0
    %1300 = vmatprep.subr.mxu0 0.0
    %1301 = vmatpush1.msra.mxu0 0.0
    %1302 = vmatprep.subr.mxu0 0.0
    %1303 = vmatpush1.msra.mxu0 0.0
    %1304 = vmatprep.subr.mxu0 0.0
    %1305 = vmatpush1.msra.mxu0 0.0
    %1306 = vmatprep.subr.mxu0 0.0
    %1307 = vmatpush1.msra.mxu0 0.0
    %1308 = vmatprep.subr.mxu0 0.0
    %1309 = vmatpush1.msra.mxu0 0.0
    %1310 = vmatprep.subr.mxu0 0.0
    %1311 = vmatpush1.msra.mxu0 0.0
    %1312 = vmatprep.subr.mxu0 0.0
    %1313 = vmatpush1.msra.mxu0 0.0
    %1314 = vmatprep.subr.mxu0 0.0
    %1315 = vmatpush1.msra.mxu0 0.0
    %1316 = vmatprep.subr.mxu0 0.0
    %1317 = vmatpush1.msra.mxu0 0.0
    %1318 = vmatprep.subr.mxu0 0.0
    %1319 = vmatpush1.msra.mxu0 0.0
    %1320 = vmatprep.subr.mxu0 0.0
    %1321 = vmatpush1.msra.mxu0 0.0
    %1322 = vmatprep.subr.mxu0 0.0
    %1323 = vmatpush1.msra.mxu0 0.0
    %1324 = vmatprep.mubr.f32.mxu0 0.0
    %1325 = vmatmul.mubr.f32.gmra.mrb[0].mxu0 %v1236
    %v1326 = vpop.f32.mrb[0].mxu0
    %v1327 = vadd.f32 %v1258, %v1326
    %v1328 = vpop.f32.mrb[0].mxu0
    %1329 = vdwg.mxu0
    %1330 = vst [vmem:[#allocation14] sm:$0xff] %v1327
    // Predicated region
    $region58: #{tpu_custom_call.1} parent=1 // pred_check
      _
    $region59: #{tpu_custom_call.1} parent=1 // pred_check_branch
      %1332 = sbr.rel (0) target = $region61
    $region60: #{tpu_custom_call.1} parent=1 // pred_region
      %s1334 = ssub.s32 128, 128
      %1335 = vsyncadd [#allocation4], %s1334
      %s1337 = sshll.u32 [#allocation14], 4
      %s1338 = int_to_ptr.vmem [resolvable:$true] %s1337
      %1340 = dma.vmem_to_hbm [thread:$0]  %s1338, 128, %s7, [#allocation4]
    $region61: #{tpu_custom_call.1} parent=1 // pred_fallthru
      _
    // Predicated region
    $region62: #{tpu_custom_call.1} parent=1 // pred_check
      _
    $region63: #{tpu_custom_call.1} parent=1 // pred_check_branch
      %1342 = sbr.rel (0) target = $region65
    $region64: #{tpu_custom_call.1} parent=1 // pred_region
      %1343 = dma.done [#allocation4], 128
    $region65: #{tpu_custom_call.1} parent=1 // pred_fallthru
      _
    %1344 = vsyncpa [#allocation3], 1
    %1345 = vsyncpa [#allocation6], 1
    %1346 = vsyncpa [#allocation9], 1
    %1347 = vsyncpa [#allocation12], 1
    %1348 = vsyncpa [#allocation4], 1

</llo_original>
